<compile_context>
chip_gen: v7x
topology: tpu7x:2x2x1
jax: 0.10.0
libtpu: 0.0.40
codegen_flags: <defaults>
</compile_context>

<pallas_src>
import functools

import jax
import jax.numpy as jnp
from jax.experimental import pallas as pl
from jax.experimental.pallas import tpu as pltpu

BN_EPS = 1e-5
LANE = 128      # pad all feature axes to multiples of this
SUBLANE = 8     # sublane granularity for batch tiles


def _round_up(n, m):
    return ((n + m - 1) // m) * m


def _pad_axis(a, target, axis):
    pad = target - a.shape[axis]
    if pad == 0:
        return a
    widths = [(0, 0)] * a.ndim
    widths[axis] = (0, pad)
    return jnp.pad(a, widths)


@functools.lru_cache(maxsize=None)
def _vmem_limit_bytes():
    """~75% of physical VMEM (96 MiB on v5e/v6e, 48 MiB on v7x)."""
    cap = 128 << 20
    try:
        info = pltpu.get_tpu_info()
        cap = int(getattr(info, "vmem_capacity_bytes", cap) or cap)
    except Exception:
        pass
    return (cap // 4) * 3


def _const_spec(shape, single_buffer):
    """BlockSpec for a block whose index never changes (weights/biases/BN vecs).

    Such blocks are fetched exactly once, so single-buffering them halves their
    resident VMEM with no DMA downside (critical on v7x's 64 MiB VMEM).
    """
    kwargs = {}
    if single_buffer and hasattr(pl, "Buffered"):
        kwargs["pipeline_mode"] = pl.Buffered(buffer_count=1)
    return pl.BlockSpec(shape, lambda i: (0, 0), **kwargs)


# ---------------------------------------------------------------------------
# Pass 1: BatchNorm batch statistics of z = x @ W1 (bias-free).
# Grid over batch tiles; the (1, Hp) sum / sum-of-squares outputs keep the same
# block index every step, so the batch axis is a reduction ("arbitrary") axis
# and the accumulators stay resident in VMEM.  Zero-padded batch rows of x
# produce all-zero rows of z and therefore contribute nothing -> no mask.
# ---------------------------------------------------------------------------
def _bn_stats_kernel(x_ref, w1_ref, sum_ref, sq_ref):
    @pl.when(pl.program_id(0) == 0)
    def _():
        sum_ref[...] = jnp.zeros_like(sum_ref)
        sq_ref[...] = jnp.zeros_like(sq_ref)

    z = jnp.dot(x_ref[...], w1_ref[...], preferred_element_type=jnp.float32)
    sum_ref[...] += jnp.sum(z, axis=0, keepdims=True)
    sq_ref[...] += jnp.sum(z * z, axis=0, keepdims=True)


# ---------------------------------------------------------------------------
# Pass 2: full forward with BN (and the Linear-1 bias, which cancels inside
# training-mode BN) pre-folded into a single per-feature scale/shift.
# Purely parallel over batch tiles (megacore-shardable on v7x).
# ---------------------------------------------------------------------------
def _mlp_fwd_kernel(x_ref, scale_ref, shift_ref,
                    w1_ref, w2_ref, b2_ref, w3_ref, b3_ref, o_ref):
    z = jnp.dot(x_ref[...], w1_ref[...], preferred_element_type=jnp.float32)
    h1 = jnp.maximum(z * scale_ref[...] + shift_ref[...], 0.0)  # folded BN + ReLU

    h2 = jnp.dot(h1.astype(jnp.bfloat16), w2_ref[...],
                 preferred_element_type=jnp.float32) + b2_ref[...]
    h2 = jnp.maximum(h2, 0.0)

    out = jnp.dot(h2.astype(jnp.bfloat16), w3_ref[...],
                  preferred_element_type=jnp.float32) + b3_ref[...]
    o_ref[...] = out.astype(o_ref.dtype)


def _mlp_forward_impl(x, params, block_b, single_buffer):
    w1, b1, g, be, w2, b2, w3, b3 = params
    B, D = x.shape
    H = w1.shape[1]
    P = w3.shape[1]

    # Lane-dense padded sizes; batch tile multiple of 16 (bf16 sublane pack).
    Dp = _round_up(D, LANE)
    Hp = _round_up(H, LANE)
    Pp = _round_up(P, LANE)
    TB = min(_round_up(block_b, 16), _round_up(B, SUBLANE))
    Bp = _round_up(B, TB)
    nb = Bp // TB

    # Activations streamed as bf16 (x is read once per pass); weights bf16 too.
    xp = _pad_axis(_pad_axis(x, Bp, 0), Dp, 1).astype(jnp.bfloat16)
    w1p = _pad_axis(_pad_axis(w1, Dp, 0), Hp, 1).astype(jnp.bfloat16)
    w2p = _pad_axis(_pad_axis(w2, Hp, 0), Hp, 1).astype(jnp.bfloat16)
    w3p = _pad_axis(_pad_axis(w3, Hp, 0), Pp, 1).astype(jnp.bfloat16)
    b2p = _pad_axis(b2, Hp, 1).astype(jnp.float32)
    b3p = _pad_axis(b3, Pp, 1).astype(jnp.float32)
    gp = _pad_axis(g, Hp, 1).astype(jnp.float32)    # padded gamma = 0 keeps pad cols at 0
    bep = _pad_axis(be, Hp, 1).astype(jnp.float32)

    full = functools.partial(_const_spec, single_buffer=single_buffer)
    vmem_limit = _vmem_limit_bytes()

    # -------- pass 1: BN batch statistics (reduction over batch tiles) --------
    bn_sum, bn_sq = pl.pallas_call(
        _bn_stats_kernel,
        out_shape=(jax.ShapeDtypeStruct((1, Hp), jnp.float32),
                   jax.ShapeDtypeStruct((1, Hp), jnp.float32)),
        grid=(nb,),
        in_specs=[pl.BlockSpec((TB, Dp), lambda i: (i, 0)),
                  full((Dp, Hp))],
        out_specs=(pl.BlockSpec((1, Hp), lambda i: (0, 0)),
                   pl.BlockSpec((1, Hp), lambda i: (0, 0))),
        compiler_params=pltpu.CompilerParams(
            dimension_semantics=("arbitrary",),
            vmem_limit_bytes=vmem_limit),
    )(xp, w1p)

    # -------- fold BN (+ Linear-1 bias) into scale/shift once, in plain JAX ----
    # With h = z + b1:  mean_h = mean_z + b1, var_h = var_z, so
    # BN(h) = (z - mean_z) * scale + beta  ->  the Linear-1 bias cancels.
    inv_b = 1.0 / B
    mean_z = bn_sum * inv_b
    var = jnp.maximum(bn_sq * inv_b - mean_z * mean_z, 0.0)
    scale = gp * jax.lax.rsqrt(var + BN_EPS)
    shift = bep - mean_z * scale

    # -------- pass 2: full forward, parallel over batch tiles --------
    out_p = pl.pallas_call(
        _mlp_fwd_kernel,
        out_shape=jax.ShapeDtypeStruct((Bp, Pp), jnp.float32),
        grid=(nb,),
        in_specs=[pl.BlockSpec((TB, Dp), lambda i: (i, 0)),
                  full((1, Hp)), full((1, Hp)),     # BN scale, shift
                  full((Dp, Hp)),                   # W1
                  full((Hp, Hp)), full((1, Hp)),    # W2, b2
                  full((Hp, Pp)), full((1, Pp))],   # W3, b3
        out_specs=pl.BlockSpec((TB, Pp), lambda i: (i, 0)),
        compiler_params=pltpu.CompilerParams(
            dimension_semantics=("parallel",),
            vmem_limit_bytes=vmem_limit),
    )(xp, scale, shift, w1p, w2p, b2p, w3p, b3p)

    return out_p[:B, :P]


_mlp_forward_jit = jax.jit(_mlp_forward_impl,
                           static_argnames=("block_b", "single_buffer"))


def mlp_forward(x, params, block_b=256):
    """Public entry point.  Prefers single-buffered constant-index weight
    blocks (Buffered(1)); falls back to default double-buffering if the
    installed jax rejects pipeline_mode on this path."""
    try:
        return _mlp_forward_jit(x, params, block_b=block_b, single_buffer=True)
    except Exception:
        return _mlp_forward_jit(x, params, block_b=block_b, single_buffer=False)


def init_params(key, dim, projection_size, hidden_size):
    """Deterministic synthetic init (shapes match nn.Linear / nn.BatchNorm1d)."""
    ks = jax.random.split(key, 6)

    def lin(kw, kb, fan_in, fan_out):
        bound = 1.0 / jnp.sqrt(fan_in)
        w = jax.random.uniform(kw, (fan_in, fan_out), jnp.float32, -bound, bound)
        b = jax.random.uniform(kb, (1, fan_out), jnp.float32, -bound, bound)
        return w, b

    w1, b1 = lin(ks[0], ks[1], dim, hidden_size)
    w2, b2 = lin(ks[2], ks[3], hidden_size, hidden_size)
    w3, b3 = lin(ks[4], ks[5], hidden_size, projection_size)
    gamma = jnp.ones((1, hidden_size), jnp.float32)   # BN weight
    beta = jnp.zeros((1, hidden_size), jnp.float32)   # BN bias
    return (w1, b1, gamma, beta, w2, b2, w3, b3)


def mlp_reference(x, params):
    """Pure-JAX reference mirroring the module (bf16 MXU operands, f32
    accumulation, training-mode BatchNorm with biased batch statistics)."""
    w1, b1, g, be, w2, b2, w3, b3 = params

    def mm(a, w):
        return jnp.dot(a.astype(jnp.bfloat16), w.astype(jnp.bfloat16),
                       preferred_element_type=jnp.float32)

    h1 = mm(x, w1) + b1
    mean = jnp.mean(h1, axis=0, keepdims=True)
    var = jnp.mean((h1 - mean) ** 2, axis=0, keepdims=True)
    scale = g * jax.lax.rsqrt(var + BN_EPS)
    shift = be - mean * scale
    h1 = jnp.maximum(h1 * scale + shift, 0.0)
    h2 = jnp.maximum(mm(h1, w2) + b2, 0.0)
    return mm(h2, w3) + b3


if __name__ == "__main__":
    key = jax.random.PRNGKey(0)

    # Test 1: small module-sized shapes (wrapper pads everything to 128 lanes).
    B, DIM, HIDDEN, PROJ = 8, 32, 64, 32
    kx, kp, k2 = jax.random.split(key, 3)
    x = jax.random.normal(kx, (B, DIM), jnp.float32)
    params = init_params(kp, DIM, PROJ, HIDDEN)

    out = jax.block_until_ready(mlp_forward(x, params))
    ref = mlp_reference(x, params)
    assert out.shape == (B, PROJ)
    assert jnp.allclose(out, ref, atol=2e-3, rtol=2e-3), \
        float(jnp.max(jnp.abs(out - ref)))

    # Test 2: non-aligned, multi-tile batch — exercises the two-pass BN
    # reduction across batch tiles (grid = 3 tiles of 128) and padded rows.
    B2, DIM2, HIDDEN2, PROJ2 = 300, 160, 256, 96
    kx2, kp2 = jax.random.split(k2)
    x2 = jax.random.normal(kx2, (B2, DIM2), jnp.float32)
    params2 = init_params(kp2, DIM2, PROJ2, HIDDEN2)

    out2 = jax.block_until_ready(mlp_forward(x2, params2, block_b=128))
    ref2 = mlp_reference(x2, params2)
    assert out2.shape == (B2, PROJ2)
    assert jnp.allclose(out2, ref2, atol=2e-3, rtol=2e-3), \
        float(jnp.max(jnp.abs(out2 - ref2)))

    print("KERNEL_OK")
</pallas_src>

<mosaic_0001>
module attributes {stable_mosaic.version = 11 : i64} {
  func.func @_mlp_fwd_kernel(%arg0: i32, %arg1: memref<8x128xbf16, #tpu.memory_space<vmem>>, %arg2: memref<1x128xf32, #tpu.memory_space<vmem>>, %arg3: memref<1x128xf32, #tpu.memory_space<vmem>>, %arg4: memref<128x128xbf16, #tpu.memory_space<vmem>>, %arg5: memref<128x128xbf16, #tpu.memory_space<vmem>>, %arg6: memref<1x128xf32, #tpu.memory_space<vmem>>, %arg7: memref<128x128xbf16, #tpu.memory_space<vmem>>, %arg8: memref<1x128xf32, #tpu.memory_space<vmem>>, %arg9: memref<8x128xf32, #tpu.memory_space<vmem>>) attributes {dimension_semantics = [#tpu.dimension_semantics<parallel>], iteration_bounds = array<i64: 1>, scalar_prefetch = 0 : i64, scratch_operands = 0 : i64, tpu.core_type = #tpu.core_type<tc>, window_params = [{transform_indices = @transform_0, window_bounds = array<i64: 8, 128>}, {pipeline_mode = #tpu.pipeline_mode<synchronous>, transform_indices = @transform_1, window_bounds = array<i64: 1, 128>}, {pipeline_mode = #tpu.pipeline_mode<synchronous>, transform_indices = @transform_2, window_bounds = array<i64: 1, 128>}, {pipeline_mode = #tpu.pipeline_mode<synchronous>, transform_indices = @transform_3, window_bounds = array<i64: 128, 128>}, {pipeline_mode = #tpu.pipeline_mode<synchronous>, transform_indices = @transform_4, window_bounds = array<i64: 128, 128>}, {pipeline_mode = #tpu.pipeline_mode<synchronous>, transform_indices = @transform_5, window_bounds = array<i64: 1, 128>}, {pipeline_mode = #tpu.pipeline_mode<synchronous>, transform_indices = @transform_6, window_bounds = array<i64: 128, 128>}, {pipeline_mode = #tpu.pipeline_mode<synchronous>, transform_indices = @transform_7, window_bounds = array<i64: 1, 128>}, {transform_indices = @transform_8, window_bounds = array<i64: 8, 128>}]} {
    %c0 = arith.constant 0 : index
    %c0_0 = arith.constant 0 : index
    %0 = vector.load %arg1[%c0, %c0_0] : memref<8x128xbf16, #tpu.memory_space<vmem>>, vector<8x128xbf16>
    %c0_1 = arith.constant 0 : index
    %c0_2 = arith.constant 0 : index
    %1 = vector.load %arg4[%c0_1, %c0_2] : memref<128x128xbf16, #tpu.memory_space<vmem>>, vector<128x128xbf16>
    %cst = arith.constant dense<0.000000e+00> : vector<8x128xf32>
    %2 = tpu.matmul %0, %1, %cst {dimension_numbers = #tpu.dot_dimension_numbers<[1], [0], [0], [1], [0, 0, 1, 1], [], []>} : vector<8x128xbf16>, vector<128x128xbf16>, vector<8x128xf32> -> vector<8x128xf32>
    %c0_3 = arith.constant 0 : index
    %c0_4 = arith.constant 0 : index
    %3 = vector.load %arg2[%c0_3, %c0_4] : memref<1x128xf32, #tpu.memory_space<vmem>>, vector<1x128xf32>
    %4 = vector.broadcast %3 : vector<1x128xf32> to vector<8x128xf32>
    %5 = arith.mulf %2, %4 : vector<8x128xf32>
    %c0_5 = arith.constant 0 : index
    %c0_6 = arith.constant 0 : index
    %6 = vector.load %arg3[%c0_5, %c0_6] : memref<1x128xf32, #tpu.memory_space<vmem>>, vector<1x128xf32>
    %7 = vector.broadcast %6 : vector<1x128xf32> to vector<8x128xf32>
    %8 = arith.addf %5, %7 : vector<8x128xf32>
    %cst_7 = arith.constant 0.000000e+00 : f32
    %9 = vector.broadcast %cst_7 : f32 to vector<8x128xf32>
    %10 = arith.maximumf %8, %9 : vector<8x128xf32>
    %11 = arith.truncf %10 : vector<8x128xf32> to vector<8x128xbf16>
    %c0_8 = arith.constant 0 : index
    %c0_9 = arith.constant 0 : index
    %12 = vector.load %arg5[%c0_8, %c0_9] : memref<128x128xbf16, #tpu.memory_space<vmem>>, vector<128x128xbf16>
    %cst_10 = arith.constant dense<0.000000e+00> : vector<8x128xf32>
    %13 = tpu.matmul %11, %12, %cst_10 {dimension_numbers = #tpu.dot_dimension_numbers<[1], [0], [0], [1], [0, 0, 1, 1], [], []>} : vector<8x128xbf16>, vector<128x128xbf16>, vector<8x128xf32> -> vector<8x128xf32>
    %c0_11 = arith.constant 0 : index
    %c0_12 = arith.constant 0 : index
    %14 = vector.load %arg6[%c0_11, %c0_12] : memref<1x128xf32, #tpu.memory_space<vmem>>, vector<1x128xf32>
    %15 = vector.broadcast %14 : vector<1x128xf32> to vector<8x128xf32>
    %16 = arith.addf %13, %15 : vector<8x128xf32>
    %cst_13 = arith.constant 0.000000e+00 : f32
    %17 = vector.broadcast %cst_13 : f32 to vector<8x128xf32>
    %18 = arith.maximumf %16, %17 : vector<8x128xf32>
    %19 = arith.truncf %18 : vector<8x128xf32> to vector<8x128xbf16>
    %c0_14 = arith.constant 0 : index
    %c0_15 = arith.constant 0 : index
    %20 = vector.load %arg7[%c0_14, %c0_15] : memref<128x128xbf16, #tpu.memory_space<vmem>>, vector<128x128xbf16>
    %cst_16 = arith.constant dense<0.000000e+00> : vector<8x128xf32>
    %21 = tpu.matmul %19, %20, %cst_16 {dimension_numbers = #tpu.dot_dimension_numbers<[1], [0], [0], [1], [0, 0, 1, 1], [], []>} : vector<8x128xbf16>, vector<128x128xbf16>, vector<8x128xf32> -> vector<8x128xf32>
    %c0_17 = arith.constant 0 : index
    %c0_18 = arith.constant 0 : index
    %22 = vector.load %arg8[%c0_17, %c0_18] : memref<1x128xf32, #tpu.memory_space<vmem>>, vector<1x128xf32>
    %23 = vector.broadcast %22 : vector<1x128xf32> to vector<8x128xf32>
    %24 = arith.addf %21, %23 : vector<8x128xf32>
    %c0_19 = arith.constant 0 : index
    %c0_20 = arith.constant 0 : index
    %25 = vector.load %arg9[%c0_19, %c0_20] : memref<8x128xf32, #tpu.memory_space<vmem>>, vector<8x128xf32>
    tpu.vector_store %arg9[%c0_19, %c0_20], %24 {strides = array<i32>} : memref<8x128xf32, #tpu.memory_space<vmem>>, vector<8x128xf32>,
    return
  }
  func.func @transform_0(%arg0: i32) -> (i32, i32) {
    %c0_i32 = arith.constant 0 : i32
    %c0_i32_0 = arith.constant 0 : i32
    return %arg0, %c0_i32 : i32, i32
  }
  func.func @transform_1(%arg0: i32) -> (i32, i32) {
    %c0_i32 = arith.constant 0 : i32
    %c0_i32_0 = arith.constant 0 : i32
    %c0_i32_1 = arith.constant 0 : i32
    return %c0_i32, %c0_i32_0 : i32, i32
  }
  func.func @transform_2(%arg0: i32) -> (i32, i32) {
    %c0_i32 = arith.constant 0 : i32
    %c0_i32_0 = arith.constant 0 : i32
    %c0_i32_1 = arith.constant 0 : i32
    return %c0_i32, %c0_i32_0 : i32, i32
  }
  func.func @transform_3(%arg0: i32) -> (i32, i32) {
    %c0_i32 = arith.constant 0 : i32
    %c0_i32_0 = arith.constant 0 : i32
    %c0_i32_1 = arith.constant 0 : i32
    return %c0_i32, %c0_i32_0 : i32, i32
  }
  func.func @transform_4(%arg0: i32) -> (i32, i32) {
    %c0_i32 = arith.constant 0 : i32
    %c0_i32_0 = arith.constant 0 : i32
    %c0_i32_1 = arith.constant 0 : i32
    return %c0_i32, %c0_i32_0 : i32, i32
  }
  func.func @transform_5(%arg0: i32) -> (i32, i32) {
    %c0_i32 = arith.constant 0 : i32
    %c0_i32_0 = arith.constant 0 : i32
    %c0_i32_1 = arith.constant 0 : i32
    return %c0_i32, %c0_i32_0 : i32, i32
  }
  func.func @transform_6(%arg0: i32) -> (i32, i32) {
    %c0_i32 = arith.constant 0 : i32
    %c0_i32_0 = arith.constant 0 : i32
    %c0_i32_1 = arith.constant 0 : i32
    return %c0_i32, %c0_i32_0 : i32, i32
  }
  func.func @transform_7(%arg0: i32) -> (i32, i32) {
    %c0_i32 = arith.constant 0 : i32
    %c0_i32_0 = arith.constant 0 : i32
    %c0_i32_1 = arith.constant 0 : i32
    return %c0_i32, %c0_i32_0 : i32, i32
  }
  func.func @transform_8(%arg0: i32) -> (i32, i32) {
    %c0_i32 = arith.constant 0 : i32
    %c0_i32_0 = arith.constant 0 : i32
    return %arg0, %c0_i32 : i32, i32
  }
}

module attributes {stable_mosaic.version = 11 : i64} {
  func.func @_bn_stats_kernel(%arg0: i32, %arg1: memref<8x128xbf16, #tpu.memory_space<vmem>>, %arg2: memref<128x128xbf16, #tpu.memory_space<vmem>>, %arg3: memref<1x128xf32, #tpu.memory_space<vmem>>, %arg4: memref<1x128xf32, #tpu.memory_space<vmem>>) attributes {dimension_semantics = [#tpu.dimension_semantics<arbitrary>], iteration_bounds = array<i64: 1>, scalar_prefetch = 0 : i64, scratch_operands = 0 : i64, tpu.core_type = #tpu.core_type<tc>, window_params = [{transform_indices = @transform_0, window_bounds = array<i64: 8, 128>}, {pipeline_mode = #tpu.pipeline_mode<synchronous>, transform_indices = @transform_1, window_bounds = array<i64: 128, 128>}, {pipeline_mode = #tpu.pipeline_mode<synchronous>, transform_indices = @transform_2, window_bounds = array<i64: 1, 128>}, {pipeline_mode = #tpu.pipeline_mode<synchronous>, transform_indices = @transform_3, window_bounds = array<i64: 1, 128>}]} {
    %c0_i32 = arith.constant 0 : i32
    %0 = arith.cmpi eq, %arg0, %c0_i32 : i32
    %1 = arith.extui %0 : i1 to i32
    %c0_i32_0 = arith.constant 0 : i32
    %2 = arith.cmpi ne, %1, %c0_i32_0 : i32
    scf.if %2 {
      %cst_14 = arith.constant 0.000000e+00 : f32
      %17 = vector.broadcast %cst_14 : f32 to vector<1x128xf32>
      %c0_15 = arith.constant 0 : index
      %c0_16 = arith.constant 0 : index
      %18 = vector.load %arg3[%c0_15, %c0_16] : memref<1x128xf32, #tpu.memory_space<vmem>>, vector<1x128xf32>
      tpu.vector_store %arg3[%c0_15, %c0_16], %17 {strides = array<i32>} : memref<1x128xf32, #tpu.memory_space<vmem>>, vector<1x128xf32>,
      %cst_17 = arith.constant 0.000000e+00 : f32
      %19 = vector.broadcast %cst_17 : f32 to vector<1x128xf32>
      %c0_18 = arith.constant 0 : index
      %c0_19 = arith.constant 0 : index
      %20 = vector.load %arg4[%c0_18, %c0_19] : memref<1x128xf32, #tpu.memory_space<vmem>>, vector<1x128xf32>
      tpu.vector_store %arg4[%c0_18, %c0_19], %19 {strides = array<i32>} : memref<1x128xf32, #tpu.memory_space<vmem>>, vector<1x128xf32>,
    } else {
    }
    %c0 = arith.constant 0 : index
    %c0_1 = arith.constant 0 : index
    %3 = vector.load %arg1[%c0, %c0_1] : memref<8x128xbf16, #tpu.memory_space<vmem>>, vector<8x128xbf16>
    %c0_2 = arith.constant 0 : index
    %c0_3 = arith.constant 0 : index
    %4 = vector.load %arg2[%c0_2, %c0_3] : memref<128x128xbf16, #tpu.memory_space<vmem>>, vector<128x128xbf16>
    %cst = arith.constant dense<0.000000e+00> : vector<8x128xf32>
    %5 = tpu.matmul %3, %4, %cst {dimension_numbers = #tpu.dot_dimension_numbers<[1], [0], [0], [1], [0, 0, 1, 1], [], []>} : vector<8x128xbf16>, vector<128x128xbf16>, vector<8x128xf32> -> vector<8x128xf32>
    %c0_4 = arith.constant 0 : index
    %c0_5 = arith.constant 0 : index
    %6 = vector.load %arg3[%c0_4, %c0_5] : memref<1x128xf32, #tpu.memory_space<vmem>>, vector<1x128xf32>
    %cst_6 = arith.constant dense<0.000000e+00> : vector<128xf32>
    %7 = vector.multi_reduction <add>, %5, %cst_6 [0] : vector<8x128xf32> to vector<128xf32>
    %8 = vector.shape_cast %7 : vector<128xf32> to vector<1x128xf32>
    %9 = arith.addf %6, %8 : vector<1x128xf32>
    %c0_7 = arith.constant 0 : index
    %c0_8 = arith.constant 0 : index
    %10 = vector.load %arg3[%c0_7, %c0_8] : memref<1x128xf32, #tpu.memory_space<vmem>>, vector<1x128xf32>
    tpu.vector_store %arg3[%c0_7, %c0_8], %9 {strides = array<i32>} : memref<1x128xf32, #tpu.memory_space<vmem>>, vector<1x128xf32>,
    %c0_9 = arith.constant 0 : index
    %c0_10 = arith.constant 0 : index
    %11 = vector.load %arg4[%c0_9, %c0_10] : memref<1x128xf32, #tpu.memory_space<vmem>>, vector<1x128xf32>
    %12 = arith.mulf %5, %5 : vector<8x128xf32>
    %cst_11 = arith.constant dense<0.000000e+00> : vector<128xf32>
    %13 = vector.multi_reduction <add>, %12, %cst_11 [0] : vector<8x128xf32> to vector<128xf32>
    %14 = vector.shape_cast %13 : vector<128xf32> to vector<1x128xf32>
    %15 = arith.addf %11, %14 : vector<1x128xf32>
    %c0_12 = arith.constant 0 : index
    %c0_13 = arith.constant 0 : index
    %16 = vector.load %arg4[%c0_12, %c0_13] : memref<1x128xf32, #tpu.memory_space<vmem>>, vector<1x128xf32>
    tpu.vector_store %arg4[%c0_12, %c0_13], %15 {strides = array<i32>} : memref<1x128xf32, #tpu.memory_space<vmem>>, vector<1x128xf32>,
    return
  }
  func.func @transform_0(%arg0: i32) -> (i32, i32) {
    %c0_i32 = arith.constant 0 : i32
    %c0_i32_0 = arith.constant 0 : i32
    return %arg0, %c0_i32 : i32, i32
  }
  func.func @transform_1(%arg0: i32) -> (i32, i32) {
    %c0_i32 = arith.constant 0 : i32
    %c0_i32_0 = arith.constant 0 : i32
    %c0_i32_1 = arith.constant 0 : i32
    return %c0_i32, %c0_i32_0 : i32, i32
  }
  func.func @transform_2(%arg0: i32) -> (i32, i32) {
    %c0_i32 = arith.constant 0 : i32
    %c0_i32_0 = arith.constant 0 : i32
    %c0_i32_1 = arith.constant 0 : i32
    return %c0_i32, %c0_i32_0 : i32, i32
  }
  func.func @transform_3(%arg0: i32) -> (i32, i32) {
    %c0_i32 = arith.constant 0 : i32
    %c0_i32_0 = arith.constant 0 : i32
    %c0_i32_1 = arith.constant 0 : i32
    return %c0_i32, %c0_i32_0 : i32, i32
  }
}

module attributes {stable_mosaic.version = 11 : i64} {
  func.func @_bn_stats_kernel(%arg0: i32, %arg1: memref<8x128xbf16, #tpu.memory_space<vmem>>, %arg2: memref<128x128xbf16, #tpu.memory_space<vmem>>, %arg3: memref<1x128xf32, #tpu.memory_space<vmem>>, %arg4: memref<1x128xf32, #tpu.memory_space<vmem>>) attributes {dimension_semantics = [#tpu.dimension_semantics<arbitrary>], iteration_bounds = array<i64: 1>, scalar_prefetch = 0 : i64, scratch_operands = 0 : i64, tpu.core_type = #tpu.core_type<tc>, window_params = [{transform_indices = @transform_0, window_bounds = array<i64: 8, 128>}, {pipeline_mode = #tpu.pipeline_mode<synchronous>, transform_indices = @transform_1, window_bounds = array<i64: 128, 128>}, {pipeline_mode = #tpu.pipeline_mode<synchronous>, transform_indices = @transform_2, window_bounds = array<i64: 1, 128>}, {pipeline_mode = #tpu.pipeline_mode<synchronous>, transform_indices = @transform_3, window_bounds = array<i64: 1, 128>}]} {
    %c0_i32 = arith.constant 0 : i32
    %0 = arith.cmpi eq, %arg0, %c0_i32 : i32
    %1 = arith.extui %0 : i1 to i32
    %c0_i32_0 = arith.constant 0 : i32
    %2 = arith.cmpi ne, %1, %c0_i32_0 : i32
    scf.if %2 {
      %cst_14 = arith.constant 0.000000e+00 : f32
      %17 = vector.broadcast %cst_14 : f32 to vector<1x128xf32>
      %c0_15 = arith.constant 0 : index
      %c0_16 = arith.constant 0 : index
      %18 = vector.load %arg3[%c0_15, %c0_16] : memref<1x128xf32, #tpu.memory_space<vmem>>, vector<1x128xf32>
      tpu.vector_store %arg3[%c0_15, %c0_16], %17 {strides = array<i32>} : memref<1x128xf32, #tpu.memory_space<vmem>>, vector<1x128xf32>,
      %cst_17 = arith.constant 0.000000e+00 : f32
      %19 = vector.broadcast %cst_17 : f32 to vector<1x128xf32>
      %c0_18 = arith.constant 0 : index
      %c0_19 = arith.constant 0 : index
      %20 = vector.load %arg4[%c0_18, %c0_19] : memref<1x128xf32, #tpu.memory_space<vmem>>, vector<1x128xf32>
      tpu.vector_store %arg4[%c0_18, %c0_19], %19 {strides = array<i32>} : memref<1x128xf32, #tpu.memory_space<vmem>>, vector<1x128xf32>,
    } else {
    }
    %c0 = arith.constant 0 : index
    %c0_1 = arith.constant 0 : index
    %3 = vector.load %arg1[%c0, %c0_1] : memref<8x128xbf16, #tpu.memory_space<vmem>>, vector<8x128xbf16>
    %c0_2 = arith.constant 0 : index
    %c0_3 = arith.constant 0 : index
    %4 = vector.load %arg2[%c0_2, %c0_3] : memref<128x128xbf16, #tpu.memory_space<vmem>>, vector<128x128xbf16>
    %cst = arith.constant dense<0.000000e+00> : vector<8x128xf32>
    %5 = tpu.matmul %3, %4, %cst {dimension_numbers = #tpu.dot_dimension_numbers<[1], [0], [0], [1], [0, 0, 1, 1], [], []>} : vector<8x128xbf16>, vector<128x128xbf16>, vector<8x128xf32> -> vector<8x128xf32>
    %c0_4 = arith.constant 0 : index
    %c0_5 = arith.constant 0 : index
    %6 = vector.load %arg3[%c0_4, %c0_5] : memref<1x128xf32, #tpu.memory_space<vmem>>, vector<1x128xf32>
    %cst_6 = arith.constant dense<0.000000e+00> : vector<128xf32>
    %7 = vector.multi_reduction <add>, %5, %cst_6 [0] : vector<8x128xf32> to vector<128xf32>
    %8 = vector.shape_cast %7 : vector<128xf32> to vector<1x128xf32>
    %9 = arith.addf %6, %8 : vector<1x128xf32>
    %c0_7 = arith.constant 0 : index
    %c0_8 = arith.constant 0 : index
    %10 = vector.load %arg3[%c0_7, %c0_8] : memref<1x128xf32, #tpu.memory_space<vmem>>, vector<1x128xf32>
    tpu.vector_store %arg3[%c0_7, %c0_8], %9 {strides = array<i32>} : memref<1x128xf32, #tpu.memory_space<vmem>>, vector<1x128xf32>,
    %c0_9 = arith.constant 0 : index
    %c0_10 = arith.constant 0 : index
    %11 = vector.load %arg4[%c0_9, %c0_10] : memref<1x128xf32, #tpu.memory_space<vmem>>, vector<1x128xf32>
    %12 = arith.mulf %5, %5 : vector<8x128xf32>
    %cst_11 = arith.constant dense<0.000000e+00> : vector<128xf32>
    %13 = vector.multi_reduction <add>, %12, %cst_11 [0] : vector<8x128xf32> to vector<128xf32>
    %14 = vector.shape_cast %13 : vector<128xf32> to vector<1x128xf32>
    %15 = arith.addf %11, %14 : vector<1x128xf32>
    %c0_12 = arith.constant 0 : index
    %c0_13 = arith.constant 0 : index
    %16 = vector.load %arg4[%c0_12, %c0_13] : memref<1x128xf32, #tpu.memory_space<vmem>>, vector<1x128xf32>
    tpu.vector_store %arg4[%c0_12, %c0_13], %15 {strides = array<i32>} : memref<1x128xf32, #tpu.memory_space<vmem>>, vector<1x128xf32>,
    return
  }
  func.func @transform_0(%arg0: i32) -> (i32, i32) {
    %c0_i32 = arith.constant 0 : i32
    %c0_i32_0 = arith.constant 0 : i32
    return %arg0, %c0_i32 : i32, i32
  }
  func.func @transform_1(%arg0: i32) -> (i32, i32) {
    %c0_i32 = arith.constant 0 : i32
    %c0_i32_0 = arith.constant 0 : i32
    %c0_i32_1 = arith.constant 0 : i32
    return %c0_i32, %c0_i32_0 : i32, i32
  }
  func.func @transform_2(%arg0: i32) -> (i32, i32) {
    %c0_i32 = arith.constant 0 : i32
    %c0_i32_0 = arith.constant 0 : i32
    %c0_i32_1 = arith.constant 0 : i32
    return %c0_i32, %c0_i32_0 : i32, i32
  }
  func.func @transform_3(%arg0: i32) -> (i32, i32) {
    %c0_i32 = arith.constant 0 : i32
    %c0_i32_0 = arith.constant 0 : i32
    %c0_i32_1 = arith.constant 0 : i32
    return %c0_i32, %c0_i32_0 : i32, i32
  }
}

module attributes {stable_mosaic.version = 11 : i64} {
  func.func @_mlp_fwd_kernel(%arg0: i32, %arg1: memref<8x128xbf16, #tpu.memory_space<vmem>>, %arg2: memref<1x128xf32, #tpu.memory_space<vmem>>, %arg3: memref<1x128xf32, #tpu.memory_space<vmem>>, %arg4: memref<128x128xbf16, #tpu.memory_space<vmem>>, %arg5: memref<128x128xbf16, #tpu.memory_space<vmem>>, %arg6: memref<1x128xf32, #tpu.memory_space<vmem>>, %arg7: memref<128x128xbf16, #tpu.memory_space<vmem>>, %arg8: memref<1x128xf32, #tpu.memory_space<vmem>>, %arg9: memref<8x128xf32, #tpu.memory_space<vmem>>) attributes {dimension_semantics = [#tpu.dimension_semantics<parallel>], iteration_bounds = array<i64: 1>, scalar_prefetch = 0 : i64, scratch_operands = 0 : i64, tpu.core_type = #tpu.core_type<tc>, window_params = [{transform_indices = @transform_0, window_bounds = array<i64: 8, 128>}, {pipeline_mode = #tpu.pipeline_mode<synchronous>, transform_indices = @transform_1, window_bounds = array<i64: 1, 128>}, {pipeline_mode = #tpu.pipeline_mode<synchronous>, transform_indices = @transform_2, window_bounds = array<i64: 1, 128>}, {pipeline_mode = #tpu.pipeline_mode<synchronous>, transform_indices = @transform_3, window_bounds = array<i64: 128, 128>}, {pipeline_mode = #tpu.pipeline_mode<synchronous>, transform_indices = @transform_4, window_bounds = array<i64: 128, 128>}, {pipeline_mode = #tpu.pipeline_mode<synchronous>, transform_indices = @transform_5, window_bounds = array<i64: 1, 128>}, {pipeline_mode = #tpu.pipeline_mode<synchronous>, transform_indices = @transform_6, window_bounds = array<i64: 128, 128>}, {pipeline_mode = #tpu.pipeline_mode<synchronous>, transform_indices = @transform_7, window_bounds = array<i64: 1, 128>}, {transform_indices = @transform_8, window_bounds = array<i64: 8, 128>}]} {
    %c0 = arith.constant 0 : index
    %c0_0 = arith.constant 0 : index
    %0 = vector.load %arg1[%c0, %c0_0] : memref<8x128xbf16, #tpu.memory_space<vmem>>, vector<8x128xbf16>
    %c0_1 = arith.constant 0 : index
    %c0_2 = arith.constant 0 : index
    %1 = vector.load %arg4[%c0_1, %c0_2] : memref<128x128xbf16, #tpu.memory_space<vmem>>, vector<128x128xbf16>
    %cst = arith.constant dense<0.000000e+00> : vector<8x128xf32>
    %2 = tpu.matmul %0, %1, %cst {dimension_numbers = #tpu.dot_dimension_numbers<[1], [0], [0], [1], [0, 0, 1, 1], [], []>} : vector<8x128xbf16>, vector<128x128xbf16>, vector<8x128xf32> -> vector<8x128xf32>
    %c0_3 = arith.constant 0 : index
    %c0_4 = arith.constant 0 : index
    %3 = vector.load %arg2[%c0_3, %c0_4] : memref<1x128xf32, #tpu.memory_space<vmem>>, vector<1x128xf32>
    %4 = vector.broadcast %3 : vector<1x128xf32> to vector<8x128xf32>
    %5 = arith.mulf %2, %4 : vector<8x128xf32>
    %c0_5 = arith.constant 0 : index
    %c0_6 = arith.constant 0 : index
    %6 = vector.load %arg3[%c0_5, %c0_6] : memref<1x128xf32, #tpu.memory_space<vmem>>, vector<1x128xf32>
    %7 = vector.broadcast %6 : vector<1x128xf32> to vector<8x128xf32>
    %8 = arith.addf %5, %7 : vector<8x128xf32>
    %cst_7 = arith.constant 0.000000e+00 : f32
    %9 = vector.broadcast %cst_7 : f32 to vector<8x128xf32>
    %10 = arith.maximumf %8, %9 : vector<8x128xf32>
    %11 = arith.truncf %10 : vector<8x128xf32> to vector<8x128xbf16>
    %c0_8 = arith.constant 0 : index
    %c0_9 = arith.constant 0 : index
    %12 = vector.load %arg5[%c0_8, %c0_9] : memref<128x128xbf16, #tpu.memory_space<vmem>>, vector<128x128xbf16>
    %cst_10 = arith.constant dense<0.000000e+00> : vector<8x128xf32>
    %13 = tpu.matmul %11, %12, %cst_10 {dimension_numbers = #tpu.dot_dimension_numbers<[1], [0], [0], [1], [0, 0, 1, 1], [], []>} : vector<8x128xbf16>, vector<128x128xbf16>, vector<8x128xf32> -> vector<8x128xf32>
    %c0_11 = arith.constant 0 : index
    %c0_12 = arith.constant 0 : index
    %14 = vector.load %arg6[%c0_11, %c0_12] : memref<1x128xf32, #tpu.memory_space<vmem>>, vector<1x128xf32>
    %15 = vector.broadcast %14 : vector<1x128xf32> to vector<8x128xf32>
    %16 = arith.addf %13, %15 : vector<8x128xf32>
    %cst_13 = arith.constant 0.000000e+00 : f32
    %17 = vector.broadcast %cst_13 : f32 to vector<8x128xf32>
    %18 = arith.maximumf %16, %17 : vector<8x128xf32>
    %19 = arith.truncf %18 : vector<8x128xf32> to vector<8x128xbf16>
    %c0_14 = arith.constant 0 : index
    %c0_15 = arith.constant 0 : index
    %20 = vector.load %arg7[%c0_14, %c0_15] : memref<128x128xbf16, #tpu.memory_space<vmem>>, vector<128x128xbf16>
    %cst_16 = arith.constant dense<0.000000e+00> : vector<8x128xf32>
    %21 = tpu.matmul %19, %20, %cst_16 {dimension_numbers = #tpu.dot_dimension_numbers<[1], [0], [0], [1], [0, 0, 1, 1], [], []>} : vector<8x128xbf16>, vector<128x128xbf16>, vector<8x128xf32> -> vector<8x128xf32>
    %c0_17 = arith.constant 0 : index
    %c0_18 = arith.constant 0 : index
    %22 = vector.load %arg8[%c0_17, %c0_18] : memref<1x128xf32, #tpu.memory_space<vmem>>, vector<1x128xf32>
    %23 = vector.broadcast %22 : vector<1x128xf32> to vector<8x128xf32>
    %24 = arith.addf %21, %23 : vector<8x128xf32>
    %c0_19 = arith.constant 0 : index
    %c0_20 = arith.constant 0 : index
    %25 = vector.load %arg9[%c0_19, %c0_20] : memref<8x128xf32, #tpu.memory_space<vmem>>, vector<8x128xf32>
    tpu.vector_store %arg9[%c0_19, %c0_20], %24 {strides = array<i32>} : memref<8x128xf32, #tpu.memory_space<vmem>>, vector<8x128xf32>,
    return
  }
  func.func @transform_0(%arg0: i32) -> (i32, i32) {
    %c0_i32 = arith.constant 0 : i32
    %c0_i32_0 = arith.constant 0 : i32
    return %arg0, %c0_i32 : i32, i32
  }
  func.func @transform_1(%arg0: i32) -> (i32, i32) {
    %c0_i32 = arith.constant 0 : i32
    %c0_i32_0 = arith.constant 0 : i32
    %c0_i32_1 = arith.constant 0 : i32
    return %c0_i32, %c0_i32_0 : i32, i32
  }
  func.func @transform_2(%arg0: i32) -> (i32, i32) {
    %c0_i32 = arith.constant 0 : i32
    %c0_i32_0 = arith.constant 0 : i32
    %c0_i32_1 = arith.constant 0 : i32
    return %c0_i32, %c0_i32_0 : i32, i32
  }
  func.func @transform_3(%arg0: i32) -> (i32, i32) {
    %c0_i32 = arith.constant 0 : i32
    %c0_i32_0 = arith.constant 0 : i32
    %c0_i32_1 = arith.constant 0 : i32
    return %c0_i32, %c0_i32_0 : i32, i32
  }
  func.func @transform_4(%arg0: i32) -> (i32, i32) {
    %c0_i32 = arith.constant 0 : i32
    %c0_i32_0 = arith.constant 0 : i32
    %c0_i32_1 = arith.constant 0 : i32
    return %c0_i32, %c0_i32_0 : i32, i32
  }
  func.func @transform_5(%arg0: i32) -> (i32, i32) {
    %c0_i32 = arith.constant 0 : i32
    %c0_i32_0 = arith.constant 0 : i32
    %c0_i32_1 = arith.constant 0 : i32
    return %c0_i32, %c0_i32_0 : i32, i32
  }
  func.func @transform_6(%arg0: i32) -> (i32, i32) {
    %c0_i32 = arith.constant 0 : i32
    %c0_i32_0 = arith.constant 0 : i32
    %c0_i32_1 = arith.constant 0 : i32
    return %c0_i32, %c0_i32_0 : i32, i32
  }
  func.func @transform_7(%arg0: i32) -> (i32, i32) {
    %c0_i32 = arith.constant 0 : i32
    %c0_i32_0 = arith.constant 0 : i32
    %c0_i32_1 = arith.constant 0 : i32
    return %c0_i32, %c0_i32_0 : i32, i32
  }
  func.func @transform_8(%arg0: i32) -> (i32, i32) {
    %c0_i32 = arith.constant 0 : i32
    %c0_i32_0 = arith.constant 0 : i32
    return %arg0, %c0_i32 : i32, i32
  }
}

</mosaic_0001>

<llo_original>
// kernel: _mlp_forward_impl.2
$region0: #{_mlp_forward_impl.2}
  #allocation0 [shape = 'u32[]', space=smem, size = 0x4, offset = 0x4, fixed_abs, tag = 'smem constant byte address 0x4 - core index']
  #allocation1 [shape = 'u32[144,128]{1,0:T(1,128)}', space=vmem, size = 0x12000, scoped, tag = 'internal scratch']
  %s0 = inlined_call_operand.hbm [shape: bf16[8,128], index: 0, kind: input, shape index: {}]
  %s1 = inlined_call_operand.hbm [shape: bf16[128,128], index: 1, kind: input, shape index: {}]
  %s2 = inlined_call_operand.hbm [shape: f32[1,128], index: 2, kind: output, shape index: {0}]
  %s3 = inlined_call_operand.hbm [shape: f32[1,128], index: 3, kind: output, shape index: {1}]
  %4 = xla_tuple %s2, %s3
  %s5 = sld [smem:[#allocation0]]
  $region38: #{_mlp_forward_impl.2} parent=0
    _
  %s7 = ssub.s32 1, %s5
  %s8 = scalar_select 0, %s7, %s5
  $region1: #{_mlp_forward_impl.2} parent=0
    #allocation2 [shape = 'u8[2048]{0}', space=vmem, size = 0x800, scoped, tag = 'input window, operand 0, single buffered']
    #allocation3 [shape = 's32[1]{0}', space=sflag, size = 0x4, scoped, tag = 'scoped memory for _mlp_forward_impl.2']
    #allocation4 [shape = 's32[1]{0}', space=sflag, size = 0x4, scoped, tag = 'scoped memory for _mlp_forward_impl.2']
    #allocation5 [shape = 'u8[32768]{0}', space=vmem, size = 0x8000, scoped, tag = 'input window, operand 1, single buffered']
    #allocation6 [shape = 's32[1]{0}', space=sflag, size = 0x4, scoped, tag = 'scoped memory for _mlp_forward_impl.2']
    #allocation7 [shape = 'u8[512]{0}', space=vmem, size = 0x400, scoped, tag = 'output window, operand 0, single buffered']
    #allocation8 [shape = 'u8[512]{0}', space=vmem, size = 0x400, scoped, tag = 'output window, operand 1, single buffered']
    #allocation9 [shape = 's32[1]{0}', space=sflag, size = 0x4, scoped, tag = 'scoped memory for _mlp_forward_impl.2']
    %9 = vsyncpa [#allocation3], 0
    %10 = vsyncpa [#allocation6], 0
    %11 = vsyncpa [#allocation4], 0
    %12 = vsyncpa [#allocation9], 0
    // Predicated region
    $region2: #{_mlp_forward_impl.2} parent=1 // pred_check
      _
    $region3: #{_mlp_forward_impl.2} parent=1 // pred_check_branch
      %14 = sbr.rel (0) target = $region5
    $region4: #{_mlp_forward_impl.2} parent=1 // pred_region
      %s16 = ssub.s32 64, 64
      %17 = vsyncadd [#allocation3], %s16
      %s19 = sshll.u32 [#allocation2], 4
      %s20 = int_to_ptr.vmem [resolvable:$true] %s19
      %22 = dma.hbm_to_vmem [thread:$0]  %s0, 64, %s20, [#allocation3]
    $region5: #{_mlp_forward_impl.2} parent=1 // pred_fallthru
      _
    // Predicated region
    $region6: #{_mlp_forward_impl.2} parent=1 // pred_check
      _
    $region7: #{_mlp_forward_impl.2} parent=1 // pred_check_branch
      %24 = sbr.rel (0) target = $region9
    $region8: #{_mlp_forward_impl.2} parent=1 // pred_region
      %s26 = ssub.s32 1024, 1024
      %27 = vsyncadd [#allocation6], %s26
      %s28 = sshll.u32 [#allocation5], 4
      %s29 = int_to_ptr.vmem [resolvable:$true] %s28
      %34 = dma.hbm_to_vmem [thread:$0]  %s1, 1024, %s29, [#allocation6], 64, 64, 4
    $region9: #{_mlp_forward_impl.2} parent=1 // pred_fallthru
      _
    // Predicated region
    $region10: #{_mlp_forward_impl.2} parent=1 // pred_check
      _
    $region11: #{_mlp_forward_impl.2} parent=1 // pred_check_branch
      %36 = sbr.rel (0) target = $region13
    $region12: #{_mlp_forward_impl.2} parent=1 // pred_region
      %37 = dma.done [#allocation3], 64
    $region13: #{_mlp_forward_impl.2} parent=1 // pred_fallthru
      _
    // Predicated region
    $region14: #{_mlp_forward_impl.2} parent=1 // pred_check
      _
    $region15: #{_mlp_forward_impl.2} parent=1 // pred_check_branch
      %39 = sbr.rel (0) target = $region17
    $region16: #{_mlp_forward_impl.2} parent=1 // pred_region
      %40 = dma.done [#allocation6], 1024
    $region17: #{_mlp_forward_impl.2} parent=1 // pred_fallthru
      _
    %p42 = scmp.eq.s32.totalorder 0, 0
    // Predicated region
    $region18: #{_mlp_forward_impl.2} parent=1 // pred_check
      %p43 = pneg %p42
    $region19: #{_mlp_forward_impl.2} parent=1 // pred_check_branch
      %45 = sbr.rel (%p43) target = $region21
    $region20: #{_mlp_forward_impl.2} parent=1 // pred_region
      %46 = vst [vmem:[#allocation7] sm:$0x1] 0.0
      %47 = vst [vmem:[#allocation8] sm:$0x1] 0.0
    $region21: #{_mlp_forward_impl.2} parent=1 // pred_fallthru
      _
    %v48 = vld [vmem:[#allocation2] sm:$0xf]
    %v49 = vld [vmem:[#allocation5] sm:$0xf]
    %v50 = vld [vmem:[#allocation5 + $0x4] sm:$0xf]
    %v51 = vld [vmem:[#allocation5 + $0x8] sm:$0xf]
    %v52 = vld [vmem:[#allocation5 + $0xc] sm:$0xf]
    %v53 = vld [vmem:[#allocation5 + $0x10] sm:$0xf]
    %v54 = vld [vmem:[#allocation5 + $0x14] sm:$0xf]
    %v55 = vld [vmem:[#allocation5 + $0x18] sm:$0xf]
    %v56 = vld [vmem:[#allocation5 + $0x1c] sm:$0xf]
    %v57 = vld [vmem:[#allocation5 + $0x20] sm:$0xf]
    %v58 = vld [vmem:[#allocation5 + $0x24] sm:$0xf]
    %v59 = vld [vmem:[#allocation5 + $0x28] sm:$0xf]
    %v60 = vld [vmem:[#allocation5 + $0x2c] sm:$0xf]
    %v61 = vld [vmem:[#allocation5 + $0x30] sm:$0xf]
    %v62 = vld [vmem:[#allocation5 + $0x34] sm:$0xf]
    %v63 = vld [vmem:[#allocation5 + $0x38] sm:$0xf]
    %v64 = vld [vmem:[#allocation5 + $0x3c] sm:$0xf]
    %v81 = vunpack.c.l.b16 %v49
    %v82 = vunpack.c.l.b16 %v50
    %v83 = vunpack.c.l.b16 %v51
    %v84 = vunpack.c.l.b16 %v52
    %v85 = vunpack.c.l.b16 %v53
    %v86 = vunpack.c.l.b16 %v54
    %v87 = vunpack.c.l.b16 %v55
    %v88 = vunpack.c.l.b16 %v56
    %v89 = vunpack.c.l.b16 %v57
    %v90 = vunpack.c.l.b16 %v58
    %v91 = vunpack.c.l.b16 %v59
    %v92 = vunpack.c.l.b16 %v60
    %v93 = vunpack.c.l.b16 %v61
    %v94 = vunpack.c.l.b16 %v62
    %v95 = vunpack.c.l.b16 %v63
    %v96 = vunpack.c.l.b16 %v64
    %v97 = vpack.c.b16 %v82, %v81
    %v98 = vpack.c.b16 %v84, %v83
    %v99 = vpack.c.b16 %v86, %v85
    %v100 = vpack.c.b16 %v88, %v87
    %v101 = vpack.c.b16 %v90, %v89
    %v102 = vpack.c.b16 %v92, %v91
    %v103 = vpack.c.b16 %v94, %v93
    %v104 = vpack.c.b16 %v96, %v95
    %113 = vmatprep.subr.bf16.mxu0 0
    %114 = vmatpush1.bf16.msra.mxu0 %v97
    %115 = vmatprep.subr.bf16.mxu0 0
    %116 = vmatpush1.bf16.msra.mxu0 %v98
    %117 = vmatprep.subr.bf16.mxu0 0
    %118 = vmatpush1.bf16.msra.mxu0 %v99
    %119 = vmatprep.subr.bf16.mxu0 0
    %120 = vmatpush1.bf16.msra.mxu0 %v100
    %121 = vmatprep.subr.bf16.mxu0 0
    %122 = vmatpush1.bf16.msra.mxu0 %v101
    %123 = vmatprep.subr.bf16.mxu0 0
    %124 = vmatpush1.bf16.msra.mxu0 %v102
    %125 = vmatprep.subr.bf16.mxu0 0
    %126 = vmatpush1.bf16.msra.mxu0 %v103
    %127 = vmatprep.subr.bf16.mxu0 0
    %128 = vmatpush1.bf16.msra.mxu0 %v104
    %129 = vmatprep.subr.bf16.mxu0 0
    %130 = vmatpush1.bf16.msra.mxu0 0
    %131 = vmatprep.subr.bf16.mxu0 0
    %132 = vmatpush1.bf16.msra.mxu0 0
    %133 = vmatprep.subr.bf16.mxu0 0
    %134 = vmatpush1.bf16.msra.mxu0 0
    %135 = vmatprep.subr.bf16.mxu0 0
    %136 = vmatpush1.bf16.msra.mxu0 0
    %137 = vmatprep.subr.bf16.mxu0 0
    %138 = vmatpush1.bf16.msra.mxu0 0
    %139 = vmatprep.subr.bf16.mxu0 0
    %140 = vmatpush1.bf16.msra.mxu0 0
    %141 = vmatprep.subr.bf16.mxu0 0
    %142 = vmatpush1.bf16.msra.mxu0 0
    %143 = vmatprep.subr.bf16.mxu0 0
    %144 = vmatpush1.bf16.msra.mxu0 0
    %145 = vmatprep.mubr.bf16.mxu0 0
    %146 = vmatmul.mubr.bf16.gmra.mrb[0].mxu0 %v48
    %v147 = vpop.f32.mrb[0].mxu0
    %v148 = vadd.f32 0.0, %v147
    %v149 = vpop.f32.mrb[0].mxu0
    %v150 = vpop.f32.mrb[0].mxu0
    %v151 = vpop.f32.mrb[0].mxu0
    %152 = vdwg.mxu0
    %v153 = vld [vmem:[#allocation7] sm:$0x1]
    %v154 = vrot.slane %v148, 4
    %v155 = vadd.f32 %v148, %v154
    %v156 = vrot.slane %v155, 2
    %v157 = vadd.f32 %v155, %v156
    %v158 = vrot.slane %v157, 1
    %v159 = vadd.f32 %v157, %v158
    %v160 = vadd.f32 %v153, %v159
    %161 = vst [vmem:[#allocation7] sm:$0x1] %v160
    %v162 = vld [vmem:[#allocation8] sm:$0x1]
    %v163 = vmul.f32 %v148, %v148
    %v164 = vrot.slane %v163, 4
    %v165 = vadd.f32 %v163, %v164
    %v166 = vrot.slane %v165, 2
    %v167 = vadd.f32 %v165, %v166
    %v168 = vrot.slane %v167, 1
    %v169 = vadd.f32 %v167, %v168
    %v170 = vadd.f32 %v162, %v169
    %171 = vst [vmem:[#allocation8] sm:$0x1] %v170
    // Predicated region
    $region22: #{_mlp_forward_impl.2} parent=1 // pred_check
      _
    $region23: #{_mlp_forward_impl.2} parent=1 // pred_check_branch
      %173 = sbr.rel (0) target = $region25
    $region24: #{_mlp_forward_impl.2} parent=1 // pred_region
      %s175 = ssub.s32 16, 16
      %176 = vsyncadd [#allocation4], %s175
      %s178 = sshll.u32 [#allocation7], 4
      %s179 = int_to_ptr.vmem [resolvable:$true] %s178
      %181 = dma.vmem_to_hbm [thread:$0]  %s179, 16, %s2, [#allocation4]
    $region25: #{_mlp_forward_impl.2} parent=1 // pred_fallthru
      _
    // Predicated region
    $region26: #{_mlp_forward_impl.2} parent=1 // pred_check
      _
    $region27: #{_mlp_forward_impl.2} parent=1 // pred_check_branch
      %183 = sbr.rel (0) target = $region29
    $region28: #{_mlp_forward_impl.2} parent=1 // pred_region
      %s185 = ssub.s32 16, 16
      %186 = vsyncadd [#allocation9], %s185
      %s188 = sshll.u32 [#allocation8], 4
      %s189 = int_to_ptr.vmem [resolvable:$true] %s188
      %191 = dma.vmem_to_hbm [thread:$0]  %s189, 16, %s3, [#allocation9]
    $region29: #{_mlp_forward_impl.2} parent=1 // pred_fallthru
      _
    // Predicated region
    $region30: #{_mlp_forward_impl.2} parent=1 // pred_check
      _
    $region31: #{_mlp_forward_impl.2} parent=1 // pred_check_branch
      %193 = sbr.rel (0) target = $region33
    $region32: #{_mlp_forward_impl.2} parent=1 // pred_region
      %194 = dma.done [#allocation4], 16
    $region33: #{_mlp_forward_impl.2} parent=1 // pred_fallthru
      _
    // Predicated region
    $region34: #{_mlp_forward_impl.2} parent=1 // pred_check
      _
    $region35: #{_mlp_forward_impl.2} parent=1 // pred_check_branch
      %196 = sbr.rel (0) target = $region37
    $region36: #{_mlp_forward_impl.2} parent=1 // pred_region
      %197 = dma.done [#allocation9], 16
    $region37: #{_mlp_forward_impl.2} parent=1 // pred_fallthru
      _
    %198 = vsyncpa [#allocation3], 1
    %199 = vsyncpa [#allocation6], 1
    %200 = vsyncpa [#allocation4], 1
    %201 = vsyncpa [#allocation9], 1

// kernel: _mlp_forward_impl.3
$region0: #{_mlp_forward_impl.3}
  #allocation0 [shape = 'u32[]', space=smem, size = 0x4, offset = 0x4, fixed_abs, tag = 'smem constant byte address 0x4 - core index']
  #allocation1 [shape = 'u32[144,128]{1,0:T(1,128)}', space=vmem, size = 0x12000, scoped, tag = 'internal scratch']
  %s0 = inlined_call_operand.hbm [shape: bf16[8,128], index: 0, kind: input, shape index: {}]
  %s1 = inlined_call_operand.hbm [shape: f32[1,128], index: 1, kind: input, shape index: {}]
  %s2 = inlined_call_operand.hbm [shape: f32[1,128], index: 2, kind: input, shape index: {}]
  %s3 = inlined_call_operand.hbm [shape: bf16[128,128], index: 3, kind: input, shape index: {}]
  %s4 = inlined_call_operand.hbm [shape: bf16[128,128], index: 4, kind: input, shape index: {}]
  %s5 = inlined_call_operand.hbm [shape: f32[1,128], index: 5, kind: input, shape index: {}]
  %s6 = inlined_call_operand.hbm [shape: bf16[128,128], index: 6, kind: input, shape index: {}]
  %s7 = inlined_call_operand.hbm [shape: f32[1,128], index: 7, kind: input, shape index: {}]
  %s8 = inlined_call_operand.hbm [shape: f32[8,128], index: 8, kind: output, shape index: {}]
  %s9 = sld [smem:[#allocation0]]
  $region74: #{_mlp_forward_impl.3} parent=0
    _
  %s11 = ssub.s32 1, %s9
  %s12 = scalar_select 0, %s11, %s9
  $region1: #{_mlp_forward_impl.3} parent=0
    #allocation2 [shape = 'u8[2048]{0}', space=vmem, size = 0x800, scoped, tag = 'input window, operand 0, single buffered']
    #allocation3 [shape = 's32[1]{0}', space=sflag, size = 0x4, scoped, tag = 'scoped memory for _mlp_forward_impl.3']
    #allocation4 [shape = 's32[1]{0}', space=sflag, size = 0x4, scoped, tag = 'scoped memory for _mlp_forward_impl.3']
    #allocation5 [shape = 'u8[512]{0}', space=vmem, size = 0x400, scoped, tag = 'input window, operand 1, single buffered']
    #allocation6 [shape = 's32[1]{0}', space=sflag, size = 0x4, scoped, tag = 'scoped memory for _mlp_forward_impl.3']
    #allocation7 [shape = 'u8[512]{0}', space=vmem, size = 0x400, scoped, tag = 'input window, operand 2, single buffered']
    #allocation8 [shape = 'u8[32768]{0}', space=vmem, size = 0x8000, scoped, tag = 'input window, operand 3, single buffered']
    #allocation9 [shape = 's32[1]{0}', space=sflag, size = 0x4, scoped, tag = 'scoped memory for _mlp_forward_impl.3']
    #allocation10 [shape = 'u8[32768]{0}', space=vmem, size = 0x8000, scoped, tag = 'input window, operand 4, single buffered']
    #allocation11 [shape = 'u8[512]{0}', space=vmem, size = 0x400, scoped, tag = 'input window, operand 5, single buffered']
    #allocation12 [shape = 's32[1]{0}', space=sflag, size = 0x4, scoped, tag = 'scoped memory for _mlp_forward_impl.3']
    #allocation13 [shape = 'u8[32768]{0}', space=vmem, size = 0x8000, scoped, tag = 'input window, operand 6, single buffered']
    #allocation14 [shape = 'u8[512]{0}', space=vmem, size = 0x400, scoped, tag = 'input window, operand 7, single buffered']
    #allocation15 [shape = 's32[1]{0}', space=sflag, size = 0x4, scoped, tag = 'scoped memory for _mlp_forward_impl.3']
    #allocation16 [shape = 'u8[4096]{0}', space=vmem, size = 0x1000, scoped, tag = 'output window, operand 0, single buffered']
    %13 = vsyncpa [#allocation3], 0
    %14 = vsyncpa [#allocation6], 0
    %15 = vsyncpa [#allocation9], 0
    %16 = vsyncpa [#allocation12], 0
    %17 = vsyncpa [#allocation15], 0
    %18 = vsyncpa [#allocation4], 0
    // Predicated region
    $region2: #{_mlp_forward_impl.3} parent=1 // pred_check
      _
    $region3: #{_mlp_forward_impl.3} parent=1 // pred_check_branch
      %20 = sbr.rel (0) target = $region5
    $region4: #{_mlp_forward_impl.3} parent=1 // pred_region
      %s22 = ssub.s32 64, 64
      %23 = vsyncadd [#allocation3], %s22
      %s25 = sshll.u32 [#allocation2], 4
      %s26 = int_to_ptr.vmem [resolvable:$true] %s25
      %28 = dma.hbm_to_vmem [thread:$0]  %s0, 64, %s26, [#allocation3]
    $region5: #{_mlp_forward_impl.3} parent=1 // pred_fallthru
      _
    // Predicated region
    $region6: #{_mlp_forward_impl.3} parent=1 // pred_check
      _
    $region7: #{_mlp_forward_impl.3} parent=1 // pred_check_branch
      %30 = sbr.rel (0) target = $region9
    $region8: #{_mlp_forward_impl.3} parent=1 // pred_region
      %s32 = ssub.s32 16, 16
      %33 = vsyncadd [#allocation6], %s32
      %s35 = sshll.u32 [#allocation5], 4
      %s36 = int_to_ptr.vmem [resolvable:$true] %s35
      %38 = dma.hbm_to_vmem [thread:$0]  %s1, 16, %s36, [#allocation6]
    $region9: #{_mlp_forward_impl.3} parent=1 // pred_fallthru
      _
    // Predicated region
    $region10: #{_mlp_forward_impl.3} parent=1 // pred_check
      _
    $region11: #{_mlp_forward_impl.3} parent=1 // pred_check_branch
      %40 = sbr.rel (0) target = $region13
    $region12: #{_mlp_forward_impl.3} parent=1 // pred_region
      %s42 = ssub.s32 16, 16
      %43 = vsyncadd [#allocation6], %s42
      %s45 = sshll.u32 [#allocation7], 4
      %s46 = int_to_ptr.vmem [resolvable:$true] %s45
      %48 = dma.hbm_to_vmem [thread:$0]  %s2, 16, %s46, [#allocation6]
    $region13: #{_mlp_forward_impl.3} parent=1 // pred_fallthru
      _
    // Predicated region
    $region14: #{_mlp_forward_impl.3} parent=1 // pred_check
      _
    $region15: #{_mlp_forward_impl.3} parent=1 // pred_check_branch
      %50 = sbr.rel (0) target = $region17
    $region16: #{_mlp_forward_impl.3} parent=1 // pred_region
      %s52 = ssub.s32 1024, 1024
      %53 = vsyncadd [#allocation9], %s52
      %s54 = sshll.u32 [#allocation8], 4
      %s55 = int_to_ptr.vmem [resolvable:$true] %s54
      %60 = dma.hbm_to_vmem [thread:$0]  %s3, 1024, %s55, [#allocation9], 64, 64, 4
    $region17: #{_mlp_forward_impl.3} parent=1 // pred_fallthru
      _
    // Predicated region
    $region18: #{_mlp_forward_impl.3} parent=1 // pred_check
      _
    $region19: #{_mlp_forward_impl.3} parent=1 // pred_check_branch
      %62 = sbr.rel (0) target = $region21
    $region20: #{_mlp_forward_impl.3} parent=1 // pred_region
      %s64 = ssub.s32 1024, 1024
      %65 = vsyncadd [#allocation9], %s64
      %s66 = sshll.u32 [#allocation10], 4
      %s67 = int_to_ptr.vmem [resolvable:$true] %s66
      %72 = dma.hbm_to_vmem [thread:$0]  %s4, 1024, %s67, [#allocation9], 64, 64, 4
    $region21: #{_mlp_forward_impl.3} parent=1 // pred_fallthru
      _
    // Predicated region
    $region22: #{_mlp_forward_impl.3} parent=1 // pred_check
      _
    $region23: #{_mlp_forward_impl.3} parent=1 // pred_check_branch
      %74 = sbr.rel (0) target = $region25
    $region24: #{_mlp_forward_impl.3} parent=1 // pred_region
      %s76 = ssub.s32 16, 16
      %77 = vsyncadd [#allocation12], %s76
      %s79 = sshll.u32 [#allocation11], 4
      %s80 = int_to_ptr.vmem [resolvable:$true] %s79
      %82 = dma.hbm_to_vmem [thread:$0]  %s5, 16, %s80, [#allocation12]
    $region25: #{_mlp_forward_impl.3} parent=1 // pred_fallthru
      _
    // Predicated region
    $region26: #{_mlp_forward_impl.3} parent=1 // pred_check
      _
    $region27: #{_mlp_forward_impl.3} parent=1 // pred_check_branch
      %84 = sbr.rel (0) target = $region29
    $region28: #{_mlp_forward_impl.3} parent=1 // pred_region
      %s86 = ssub.s32 1024, 1024
      %87 = vsyncadd [#allocation12], %s86
      %s88 = sshll.u32 [#allocation13], 4
      %s89 = int_to_ptr.vmem [resolvable:$true] %s88
      %94 = dma.hbm_to_vmem [thread:$0]  %s6, 1024, %s89, [#allocation12], 64, 64, 4
    $region29: #{_mlp_forward_impl.3} parent=1 // pred_fallthru
      _
    // Predicated region
    $region30: #{_mlp_forward_impl.3} parent=1 // pred_check
      _
    $region31: #{_mlp_forward_impl.3} parent=1 // pred_check_branch
      %96 = sbr.rel (0) target = $region33
    $region32: #{_mlp_forward_impl.3} parent=1 // pred_region
      %s98 = ssub.s32 16, 16
      %99 = vsyncadd [#allocation15], %s98
      %s101 = sshll.u32 [#allocation14], 4
      %s102 = int_to_ptr.vmem [resolvable:$true] %s101
      %104 = dma.hbm_to_vmem [thread:$0]  %s7, 16, %s102, [#allocation15]
    $region33: #{_mlp_forward_impl.3} parent=1 // pred_fallthru
      _
    // Predicated region
    $region34: #{_mlp_forward_impl.3} parent=1 // pred_check
      _
    $region35: #{_mlp_forward_impl.3} parent=1 // pred_check_branch
      %106 = sbr.rel (0) target = $region37
    $region36: #{_mlp_forward_impl.3} parent=1 // pred_region
      %107 = dma.done [#allocation3], 64
    $region37: #{_mlp_forward_impl.3} parent=1 // pred_fallthru
      _
    // Predicated region
    $region38: #{_mlp_forward_impl.3} parent=1 // pred_check
      _
    $region39: #{_mlp_forward_impl.3} parent=1 // pred_check_branch
      %109 = sbr.rel (0) target = $region41
    $region40: #{_mlp_forward_impl.3} parent=1 // pred_region
      %110 = dma.done [#allocation6], 16
    $region41: #{_mlp_forward_impl.3} parent=1 // pred_fallthru
      _
    // Predicated region
    $region42: #{_mlp_forward_impl.3} parent=1 // pred_check
      _
    $region43: #{_mlp_forward_impl.3} parent=1 // pred_check_branch
      %112 = sbr.rel (0) target = $region45
    $region44: #{_mlp_forward_impl.3} parent=1 // pred_region
      %113 = dma.done [#allocation6], 16
    $region45: #{_mlp_forward_impl.3} parent=1 // pred_fallthru
      _
    // Predicated region
    $region46: #{_mlp_forward_impl.3} parent=1 // pred_check
      _
    $region47: #{_mlp_forward_impl.3} parent=1 // pred_check_branch
      %115 = sbr.rel (0) target = $region49
    $region48: #{_mlp_forward_impl.3} parent=1 // pred_region
      %116 = dma.done [#allocation9], 1024
    $region49: #{_mlp_forward_impl.3} parent=1 // pred_fallthru
      _
    // Predicated region
    $region50: #{_mlp_forward_impl.3} parent=1 // pred_check
      _
    $region51: #{_mlp_forward_impl.3} parent=1 // pred_check_branch
      %118 = sbr.rel (0) target = $region53
    $region52: #{_mlp_forward_impl.3} parent=1 // pred_region
      %119 = dma.done [#allocation9], 1024
    $region53: #{_mlp_forward_impl.3} parent=1 // pred_fallthru
      _
    // Predicated region
    $region54: #{_mlp_forward_impl.3} parent=1 // pred_check
      _
    $region55: #{_mlp_forward_impl.3} parent=1 // pred_check_branch
      %121 = sbr.rel (0) target = $region57
    $region56: #{_mlp_forward_impl.3} parent=1 // pred_region
      %122 = dma.done [#allocation12], 16
    $region57: #{_mlp_forward_impl.3} parent=1 // pred_fallthru
      _
    // Predicated region
    $region58: #{_mlp_forward_impl.3} parent=1 // pred_check
      _
    $region59: #{_mlp_forward_impl.3} parent=1 // pred_check_branch
      %124 = sbr.rel (0) target = $region61
    $region60: #{_mlp_forward_impl.3} parent=1 // pred_region
      %125 = dma.done [#allocation12], 1024
    $region61: #{_mlp_forward_impl.3} parent=1 // pred_fallthru
      _
    // Predicated region
    $region62: #{_mlp_forward_impl.3} parent=1 // pred_check
      _
    $region63: #{_mlp_forward_impl.3} parent=1 // pred_check_branch
      %127 = sbr.rel (0) target = $region65
    $region64: #{_mlp_forward_impl.3} parent=1 // pred_region
      %128 = dma.done [#allocation15], 16
    $region65: #{_mlp_forward_impl.3} parent=1 // pred_fallthru
      _
    %v130 = vld [vmem:[#allocation2] sm:$0xf]
    %v131 = vld [vmem:[#allocation8] sm:$0xf]
    %v132 = vld [vmem:[#allocation8 + $0x4] sm:$0xf]
    %v133 = vld [vmem:[#allocation8 + $0x8] sm:$0xf]
    %v134 = vld [vmem:[#allocation8 + $0xc] sm:$0xf]
    %v135 = vld [vmem:[#allocation8 + $0x10] sm:$0xf]
    %v136 = vld [vmem:[#allocation8 + $0x14] sm:$0xf]
    %v137 = vld [vmem:[#allocation8 + $0x18] sm:$0xf]
    %v138 = vld [vmem:[#allocation8 + $0x1c] sm:$0xf]
    %v139 = vld [vmem:[#allocation8 + $0x20] sm:$0xf]
    %v140 = vld [vmem:[#allocation8 + $0x24] sm:$0xf]
    %v141 = vld [vmem:[#allocation8 + $0x28] sm:$0xf]
    %v142 = vld [vmem:[#allocation8 + $0x2c] sm:$0xf]
    %v143 = vld [vmem:[#allocation8 + $0x30] sm:$0xf]
    %v144 = vld [vmem:[#allocation8 + $0x34] sm:$0xf]
    %v145 = vld [vmem:[#allocation8 + $0x38] sm:$0xf]
    %v146 = vld [vmem:[#allocation8 + $0x3c] sm:$0xf]
    %v163 = vunpack.c.l.b16 %v131
    %v164 = vunpack.c.l.b16 %v132
    %v165 = vunpack.c.l.b16 %v133
    %v166 = vunpack.c.l.b16 %v134
    %v167 = vunpack.c.l.b16 %v135
    %v168 = vunpack.c.l.b16 %v136
    %v169 = vunpack.c.l.b16 %v137
    %v170 = vunpack.c.l.b16 %v138
    %v171 = vunpack.c.l.b16 %v139
    %v172 = vunpack.c.l.b16 %v140
    %v173 = vunpack.c.l.b16 %v141
    %v174 = vunpack.c.l.b16 %v142
    %v175 = vunpack.c.l.b16 %v143
    %v176 = vunpack.c.l.b16 %v144
    %v177 = vunpack.c.l.b16 %v145
    %v178 = vunpack.c.l.b16 %v146
    %v179 = vpack.c.b16 %v164, %v163
    %v180 = vpack.c.b16 %v166, %v165
    %v181 = vpack.c.b16 %v168, %v167
    %v182 = vpack.c.b16 %v170, %v169
    %v183 = vpack.c.b16 %v172, %v171
    %v184 = vpack.c.b16 %v174, %v173
    %v185 = vpack.c.b16 %v176, %v175
    %v186 = vpack.c.b16 %v178, %v177
    %195 = vmatprep.subr.bf16.mxu0 0
    %196 = vmatpush1.bf16.msra.mxu0 %v179
    %197 = vmatprep.subr.bf16.mxu0 0
    %198 = vmatpush1.bf16.msra.mxu0 %v180
    %199 = vmatprep.subr.bf16.mxu0 0
    %200 = vmatpush1.bf16.msra.mxu0 %v181
    %201 = vmatprep.subr.bf16.mxu0 0
    %202 = vmatpush1.bf16.msra.mxu0 %v182
    %203 = vmatprep.subr.bf16.mxu0 0
    %204 = vmatpush1.bf16.msra.mxu0 %v183
    %205 = vmatprep.subr.bf16.mxu0 0
    %206 = vmatpush1.bf16.msra.mxu0 %v184
    %207 = vmatprep.subr.bf16.mxu0 0
    %208 = vmatpush1.bf16.msra.mxu0 %v185
    %209 = vmatprep.subr.bf16.mxu0 0
    %210 = vmatpush1.bf16.msra.mxu0 %v186
    %211 = vmatprep.subr.bf16.mxu0 0
    %212 = vmatpush1.bf16.msra.mxu0 0
    %213 = vmatprep.subr.bf16.mxu0 0
    %214 = vmatpush1.bf16.msra.mxu0 0
    %215 = vmatprep.subr.bf16.mxu0 0
    %216 = vmatpush1.bf16.msra.mxu0 0
    %217 = vmatprep.subr.bf16.mxu0 0
    %218 = vmatpush1.bf16.msra.mxu0 0
    %219 = vmatprep.subr.bf16.mxu0 0
    %220 = vmatpush1.bf16.msra.mxu0 0
    %221 = vmatprep.subr.bf16.mxu0 0
    %222 = vmatpush1.bf16.msra.mxu0 0
    %223 = vmatprep.subr.bf16.mxu0 0
    %224 = vmatpush1.bf16.msra.mxu0 0
    %225 = vmatprep.subr.bf16.mxu0 0
    %226 = vmatpush1.bf16.msra.mxu0 0
    %227 = vmatprep.mubr.bf16.mxu0 0
    %228 = vmatmul.mubr.bf16.gmra.mrb[0].mxu0 %v130
    %v229 = vpop.f32.mrb[0].mxu0
    %v230 = vadd.f32 0.0, %v229
    %v231 = vpop.f32.mrb[0].mxu0
    %v232 = vpop.f32.mrb[0].mxu0
    %v233 = vpop.f32.mrb[0].mxu0
    %234 = vdwg.mxu0
    %v235 = vld [vmem:[#allocation5] sm:$0x1]
    %v237 = vlaneseq
    %v238 = vshrl.u32 %v237, 7
    %v239 = vsub.s32 0, %v238
    %v240 = vrot.slane %v235, %v239
    %v242 = vmul.f32 %v230, %v240
    %v243 = vld [vmem:[#allocation7] sm:$0x1]
    %v245 = vlaneseq
    %v246 = vshrl.u32 %v245, 7
    %v247 = vsub.s32 0, %v246
    %v248 = vrot.slane %v243, %v247
    %v250 = vadd.f32 %v242, %v248
    %v251 = vmax.f32 %v250, 0.0
    %v252 = vpack.c.bf16 %v251, %v251
    %v253 = vld [vmem:[#allocation10] sm:$0xf]
    %v254 = vld [vmem:[#allocation10 + $0x4] sm:$0xf]
    %v255 = vld [vmem:[#allocation10 + $0x8] sm:$0xf]
    %v256 = vld [vmem:[#allocation10 + $0xc] sm:$0xf]
    %v257 = vld [vmem:[#allocation10 + $0x10] sm:$0xf]
    %v258 = vld [vmem:[#allocation10 + $0x14] sm:$0xf]
    %v259 = vld [vmem:[#allocation10 + $0x18] sm:$0xf]
    %v260 = vld [vmem:[#allocation10 + $0x1c] sm:$0xf]
    %v261 = vld [vmem:[#allocation10 + $0x20] sm:$0xf]
    %v262 = vld [vmem:[#allocation10 + $0x24] sm:$0xf]
    %v263 = vld [vmem:[#allocation10 + $0x28] sm:$0xf]
    %v264 = vld [vmem:[#allocation10 + $0x2c] sm:$0xf]
    %v265 = vld [vmem:[#allocation10 + $0x30] sm:$0xf]
    %v266 = vld [vmem:[#allocation10 + $0x34] sm:$0xf]
    %v267 = vld [vmem:[#allocation10 + $0x38] sm:$0xf]
    %v268 = vld [vmem:[#allocation10 + $0x3c] sm:$0xf]
    %v269 = vld [vmem:[#allocation11] sm:$0x1]
    %v271 = vlaneseq
    %v272 = vshrl.u32 %v271, 7
    %v273 = vsub.s32 0, %v272
    %v274 = vrot.slane %v269, %v273
    %v292 = vunpack.c.l.b16 %v253
    %v293 = vunpack.c.l.b16 %v254
    %v294 = vunpack.c.l.b16 %v255
    %v295 = vunpack.c.l.b16 %v256
    %v296 = vunpack.c.l.b16 %v257
    %v297 = vunpack.c.l.b16 %v258
    %v298 = vunpack.c.l.b16 %v259
    %v299 = vunpack.c.l.b16 %v260
    %v300 = vunpack.c.l.b16 %v261
    %v301 = vunpack.c.l.b16 %v262
    %v302 = vunpack.c.l.b16 %v263
    %v303 = vunpack.c.l.b16 %v264
    %v304 = vunpack.c.l.b16 %v265
    %v305 = vunpack.c.l.b16 %v266
    %v306 = vunpack.c.l.b16 %v267
    %v307 = vunpack.c.l.b16 %v268
    %v308 = vpack.c.b16 %v293, %v292
    %v309 = vpack.c.b16 %v295, %v294
    %v310 = vpack.c.b16 %v297, %v296
    %v311 = vpack.c.b16 %v299, %v298
    %v312 = vpack.c.b16 %v301, %v300
    %v313 = vpack.c.b16 %v303, %v302
    %v314 = vpack.c.b16 %v305, %v304
    %v315 = vpack.c.b16 %v307, %v306
    %324 = vmatprep.subr.bf16.mxu0 0
    %325 = vmatpush1.bf16.msra.mxu0 %v308
    %326 = vmatprep.subr.bf16.mxu0 0
    %327 = vmatpush1.bf16.msra.mxu0 %v309
    %328 = vmatprep.subr.bf16.mxu0 0
    %329 = vmatpush1.bf16.msra.mxu0 %v310
    %330 = vmatprep.subr.bf16.mxu0 0
    %331 = vmatpush1.bf16.msra.mxu0 %v311
    %332 = vmatprep.subr.bf16.mxu0 0
    %333 = vmatpush1.bf16.msra.mxu0 %v312
    %334 = vmatprep.subr.bf16.mxu0 0
    %335 = vmatpush1.bf16.msra.mxu0 %v313
    %336 = vmatprep.subr.bf16.mxu0 0
    %337 = vmatpush1.bf16.msra.mxu0 %v314
    %338 = vmatprep.subr.bf16.mxu0 0
    %339 = vmatpush1.bf16.msra.mxu0 %v315
    %340 = vmatprep.subr.bf16.mxu0 0
    %341 = vmatpush1.bf16.msra.mxu0 0
    %342 = vmatprep.subr.bf16.mxu0 0
    %343 = vmatpush1.bf16.msra.mxu0 0
    %344 = vmatprep.subr.bf16.mxu0 0
    %345 = vmatpush1.bf16.msra.mxu0 0
    %346 = vmatprep.subr.bf16.mxu0 0
    %347 = vmatpush1.bf16.msra.mxu0 0
    %348 = vmatprep.subr.bf16.mxu0 0
    %349 = vmatpush1.bf16.msra.mxu0 0
    %350 = vmatprep.subr.bf16.mxu0 0
    %351 = vmatpush1.bf16.msra.mxu0 0
    %352 = vmatprep.subr.bf16.mxu0 0
    %353 = vmatpush1.bf16.msra.mxu0 0
    %354 = vmatprep.subr.bf16.mxu0 0
    %355 = vmatpush1.bf16.msra.mxu0 0
    %356 = vmatprep.mubr.bf16.mxu0 0
    %357 = vmatmul.mubr.bf16.gmra.mrb[0].mxu0 %v252
    %v358 = vpop.f32.mrb[0].mxu0
    %v359 = vadd.f32 %v274, %v358
    %v360 = vpop.f32.mrb[0].mxu0
    %v361 = vpop.f32.mrb[0].mxu0
    %v362 = vpop.f32.mrb[0].mxu0
    %363 = vdwg.mxu0
    %v364 = vmax.f32 %v359, 0.0
    %v365 = vpack.c.bf16 %v364, %v364
    %v366 = vld [vmem:[#allocation13] sm:$0xf]
    %v367 = vld [vmem:[#allocation13 + $0x4] sm:$0xf]
    %v368 = vld [vmem:[#allocation13 + $0x8] sm:$0xf]
    %v369 = vld [vmem:[#allocation13 + $0xc] sm:$0xf]
    %v370 = vld [vmem:[#allocation13 + $0x10] sm:$0xf]
    %v371 = vld [vmem:[#allocation13 + $0x14] sm:$0xf]
    %v372 = vld [vmem:[#allocation13 + $0x18] sm:$0xf]
    %v373 = vld [vmem:[#allocation13 + $0x1c] sm:$0xf]
    %v374 = vld [vmem:[#allocation13 + $0x20] sm:$0xf]
    %v375 = vld [vmem:[#allocation13 + $0x24] sm:$0xf]
    %v376 = vld [vmem:[#allocation13 + $0x28] sm:$0xf]
    %v377 = vld [vmem:[#allocation13 + $0x2c] sm:$0xf]
    %v378 = vld [vmem:[#allocation13 + $0x30] sm:$0xf]
    %v379 = vld [vmem:[#allocation13 + $0x34] sm:$0xf]
    %v380 = vld [vmem:[#allocation13 + $0x38] sm:$0xf]
    %v381 = vld [vmem:[#allocation13 + $0x3c] sm:$0xf]
    %v382 = vld [vmem:[#allocation14] sm:$0x1]
    %v384 = vlaneseq
    %v385 = vshrl.u32 %v384, 7
    %v386 = vsub.s32 0, %v385
    %v387 = vrot.slane %v382, %v386
    %v405 = vunpack.c.l.b16 %v366
    %v406 = vunpack.c.l.b16 %v367
    %v407 = vunpack.c.l.b16 %v368
    %v408 = vunpack.c.l.b16 %v369
    %v409 = vunpack.c.l.b16 %v370
    %v410 = vunpack.c.l.b16 %v371
    %v411 = vunpack.c.l.b16 %v372
    %v412 = vunpack.c.l.b16 %v373
    %v413 = vunpack.c.l.b16 %v374
    %v414 = vunpack.c.l.b16 %v375
    %v415 = vunpack.c.l.b16 %v376
    %v416 = vunpack.c.l.b16 %v377
    %v417 = vunpack.c.l.b16 %v378
    %v418 = vunpack.c.l.b16 %v379
    %v419 = vunpack.c.l.b16 %v380
    %v420 = vunpack.c.l.b16 %v381
    %v421 = vpack.c.b16 %v406, %v405
    %v422 = vpack.c.b16 %v408, %v407
    %v423 = vpack.c.b16 %v410, %v409
    %v424 = vpack.c.b16 %v412, %v411
    %v425 = vpack.c.b16 %v414, %v413
    %v426 = vpack.c.b16 %v416, %v415
    %v427 = vpack.c.b16 %v418, %v417
    %v428 = vpack.c.b16 %v420, %v419
    %437 = vmatprep.subr.bf16.mxu0 0
    %438 = vmatpush1.bf16.msra.mxu0 %v421
    %439 = vmatprep.subr.bf16.mxu0 0
    %440 = vmatpush1.bf16.msra.mxu0 %v422
    %441 = vmatprep.subr.bf16.mxu0 0
    %442 = vmatpush1.bf16.msra.mxu0 %v423
    %443 = vmatprep.subr.bf16.mxu0 0
    %444 = vmatpush1.bf16.msra.mxu0 %v424
    %445 = vmatprep.subr.bf16.mxu0 0
    %446 = vmatpush1.bf16.msra.mxu0 %v425
    %447 = vmatprep.subr.bf16.mxu0 0
    %448 = vmatpush1.bf16.msra.mxu0 %v426
    %449 = vmatprep.subr.bf16.mxu0 0
    %450 = vmatpush1.bf16.msra.mxu0 %v427
    %451 = vmatprep.subr.bf16.mxu0 0
    %452 = vmatpush1.bf16.msra.mxu0 %v428
    %453 = vmatprep.subr.bf16.mxu0 0
    %454 = vmatpush1.bf16.msra.mxu0 0
    %455 = vmatprep.subr.bf16.mxu0 0
    %456 = vmatpush1.bf16.msra.mxu0 0
    %457 = vmatprep.subr.bf16.mxu0 0
    %458 = vmatpush1.bf16.msra.mxu0 0
    %459 = vmatprep.subr.bf16.mxu0 0
    %460 = vmatpush1.bf16.msra.mxu0 0
    %461 = vmatprep.subr.bf16.mxu0 0
    %462 = vmatpush1.bf16.msra.mxu0 0
    %463 = vmatprep.subr.bf16.mxu0 0
    %464 = vmatpush1.bf16.msra.mxu0 0
    %465 = vmatprep.subr.bf16.mxu0 0
    %466 = vmatpush1.bf16.msra.mxu0 0
    %467 = vmatprep.subr.bf16.mxu0 0
    %468 = vmatpush1.bf16.msra.mxu0 0
    %469 = vmatprep.mubr.bf16.mxu0 0
    %470 = vmatmul.mubr.bf16.gmra.mrb[0].mxu0 %v365
    %v471 = vpop.f32.mrb[0].mxu0
    %v472 = vadd.f32 %v387, %v471
    %v473 = vpop.f32.mrb[0].mxu0
    %v474 = vpop.f32.mrb[0].mxu0
    %v475 = vpop.f32.mrb[0].mxu0
    %476 = vdwg.mxu0
    %477 = vst [vmem:[#allocation16] sm:$0xff] %v472
    // Predicated region
    $region66: #{_mlp_forward_impl.3} parent=1 // pred_check
      _
    $region67: #{_mlp_forward_impl.3} parent=1 // pred_check_branch
      %479 = sbr.rel (0) target = $region69
    $region68: #{_mlp_forward_impl.3} parent=1 // pred_region
      %s481 = ssub.s32 128, 128
      %482 = vsyncadd [#allocation4], %s481
      %s484 = sshll.u32 [#allocation16], 4
      %s485 = int_to_ptr.vmem [resolvable:$true] %s484
      %487 = dma.vmem_to_hbm [thread:$0]  %s485, 128, %s8, [#allocation4]
    $region69: #{_mlp_forward_impl.3} parent=1 // pred_fallthru
      _
    // Predicated region
    $region70: #{_mlp_forward_impl.3} parent=1 // pred_check
      _
    $region71: #{_mlp_forward_impl.3} parent=1 // pred_check_branch
      %489 = sbr.rel (0) target = $region73
    $region72: #{_mlp_forward_impl.3} parent=1 // pred_region
      %490 = dma.done [#allocation4], 128
    $region73: #{_mlp_forward_impl.3} parent=1 // pred_fallthru
      _
    %491 = vsyncpa [#allocation3], 1
    %492 = vsyncpa [#allocation6], 1
    %493 = vsyncpa [#allocation9], 1
    %494 = vsyncpa [#allocation12], 1
    %495 = vsyncpa [#allocation15], 1
    %496 = vsyncpa [#allocation4], 1

// kernel: _mlp_forward_impl.2
$region0: #{_mlp_forward_impl.2}
  #allocation0 [shape = 'u32[]', space=smem, size = 0x4, offset = 0x4, fixed_abs, tag = 'smem constant byte address 0x4 - core index']
  #allocation1 [shape = 'u32[144,128]{1,0:T(1,128)}', space=vmem, size = 0x12000, scoped, tag = 'internal scratch']
  %s0 = inlined_call_operand.hbm [shape: bf16[8,128], index: 0, kind: input, shape index: {}]
  %s1 = inlined_call_operand.hbm [shape: bf16[128,128], index: 1, kind: input, shape index: {}]
  %s2 = inlined_call_operand.hbm [shape: f32[1,128], index: 2, kind: output, shape index: {0}]
  %s3 = inlined_call_operand.hbm [shape: f32[1,128], index: 3, kind: output, shape index: {1}]
  %4 = xla_tuple %s2, %s3
  %s5 = sld [smem:[#allocation0]]
  $region38: #{_mlp_forward_impl.2} parent=0
    _
  %s7 = ssub.s32 1, %s5
  %s8 = scalar_select 0, %s7, %s5
  $region1: #{_mlp_forward_impl.2} parent=0
    #allocation2 [shape = 'u8[2048]{0}', space=vmem, size = 0x800, scoped, tag = 'input window, operand 0, single buffered']
    #allocation3 [shape = 's32[1]{0}', space=sflag, size = 0x4, scoped, tag = 'scoped memory for _mlp_forward_impl.2']
    #allocation4 [shape = 's32[1]{0}', space=sflag, size = 0x4, scoped, tag = 'scoped memory for _mlp_forward_impl.2']
    #allocation5 [shape = 'u8[32768]{0}', space=vmem, size = 0x8000, scoped, tag = 'input window, operand 1, single buffered']
    #allocation6 [shape = 's32[1]{0}', space=sflag, size = 0x4, scoped, tag = 'scoped memory for _mlp_forward_impl.2']
    #allocation7 [shape = 'u8[512]{0}', space=vmem, size = 0x400, scoped, tag = 'output window, operand 0, single buffered']
    #allocation8 [shape = 'u8[512]{0}', space=vmem, size = 0x400, scoped, tag = 'output window, operand 1, single buffered']
    #allocation9 [shape = 's32[1]{0}', space=sflag, size = 0x4, scoped, tag = 'scoped memory for _mlp_forward_impl.2']
    %9 = vsyncpa [#allocation3], 0
    %10 = vsyncpa [#allocation6], 0
    %11 = vsyncpa [#allocation4], 0
    %12 = vsyncpa [#allocation9], 0
    // Predicated region
    $region2: #{_mlp_forward_impl.2} parent=1 // pred_check
      _
    $region3: #{_mlp_forward_impl.2} parent=1 // pred_check_branch
      %14 = sbr.rel (0) target = $region5
    $region4: #{_mlp_forward_impl.2} parent=1 // pred_region
      %s16 = ssub.s32 64, 64
      %17 = vsyncadd [#allocation3], %s16
      %s19 = sshll.u32 [#allocation2], 4
      %s20 = int_to_ptr.vmem [resolvable:$true] %s19
      %22 = dma.hbm_to_vmem [thread:$0]  %s0, 64, %s20, [#allocation3]
    $region5: #{_mlp_forward_impl.2} parent=1 // pred_fallthru
      _
    // Predicated region
    $region6: #{_mlp_forward_impl.2} parent=1 // pred_check
      _
    $region7: #{_mlp_forward_impl.2} parent=1 // pred_check_branch
      %24 = sbr.rel (0) target = $region9
    $region8: #{_mlp_forward_impl.2} parent=1 // pred_region
      %s26 = ssub.s32 1024, 1024
      %27 = vsyncadd [#allocation6], %s26
      %s28 = sshll.u32 [#allocation5], 4
      %s29 = int_to_ptr.vmem [resolvable:$true] %s28
      %34 = dma.hbm_to_vmem [thread:$0]  %s1, 1024, %s29, [#allocation6], 64, 64, 4
    $region9: #{_mlp_forward_impl.2} parent=1 // pred_fallthru
      _
    // Predicated region
    $region10: #{_mlp_forward_impl.2} parent=1 // pred_check
      _
    $region11: #{_mlp_forward_impl.2} parent=1 // pred_check_branch
      %36 = sbr.rel (0) target = $region13
    $region12: #{_mlp_forward_impl.2} parent=1 // pred_region
      %37 = dma.done [#allocation3], 64
    $region13: #{_mlp_forward_impl.2} parent=1 // pred_fallthru
      _
    // Predicated region
    $region14: #{_mlp_forward_impl.2} parent=1 // pred_check
      _
    $region15: #{_mlp_forward_impl.2} parent=1 // pred_check_branch
      %39 = sbr.rel (0) target = $region17
    $region16: #{_mlp_forward_impl.2} parent=1 // pred_region
      %40 = dma.done [#allocation6], 1024
    $region17: #{_mlp_forward_impl.2} parent=1 // pred_fallthru
      _
    %p42 = scmp.eq.s32.totalorder 0, 0
    // Predicated region
    $region18: #{_mlp_forward_impl.2} parent=1 // pred_check
      %p43 = pneg %p42
    $region19: #{_mlp_forward_impl.2} parent=1 // pred_check_branch
      %45 = sbr.rel (%p43) target = $region21
    $region20: #{_mlp_forward_impl.2} parent=1 // pred_region
      %46 = vst [vmem:[#allocation7] sm:$0x1] 0.0
      %47 = vst [vmem:[#allocation8] sm:$0x1] 0.0
    $region21: #{_mlp_forward_impl.2} parent=1 // pred_fallthru
      _
    %v48 = vld [vmem:[#allocation2] sm:$0xf]
    %v49 = vld [vmem:[#allocation5] sm:$0xf]
    %v50 = vld [vmem:[#allocation5 + $0x4] sm:$0xf]
    %v51 = vld [vmem:[#allocation5 + $0x8] sm:$0xf]
    %v52 = vld [vmem:[#allocation5 + $0xc] sm:$0xf]
    %v53 = vld [vmem:[#allocation5 + $0x10] sm:$0xf]
    %v54 = vld [vmem:[#allocation5 + $0x14] sm:$0xf]
    %v55 = vld [vmem:[#allocation5 + $0x18] sm:$0xf]
    %v56 = vld [vmem:[#allocation5 + $0x1c] sm:$0xf]
    %v57 = vld [vmem:[#allocation5 + $0x20] sm:$0xf]
    %v58 = vld [vmem:[#allocation5 + $0x24] sm:$0xf]
    %v59 = vld [vmem:[#allocation5 + $0x28] sm:$0xf]
    %v60 = vld [vmem:[#allocation5 + $0x2c] sm:$0xf]
    %v61 = vld [vmem:[#allocation5 + $0x30] sm:$0xf]
    %v62 = vld [vmem:[#allocation5 + $0x34] sm:$0xf]
    %v63 = vld [vmem:[#allocation5 + $0x38] sm:$0xf]
    %v64 = vld [vmem:[#allocation5 + $0x3c] sm:$0xf]
    %v81 = vunpack.c.l.b16 %v49
    %v82 = vunpack.c.l.b16 %v50
    %v83 = vunpack.c.l.b16 %v51
    %v84 = vunpack.c.l.b16 %v52
    %v85 = vunpack.c.l.b16 %v53
    %v86 = vunpack.c.l.b16 %v54
    %v87 = vunpack.c.l.b16 %v55
    %v88 = vunpack.c.l.b16 %v56
    %v89 = vunpack.c.l.b16 %v57
    %v90 = vunpack.c.l.b16 %v58
    %v91 = vunpack.c.l.b16 %v59
    %v92 = vunpack.c.l.b16 %v60
    %v93 = vunpack.c.l.b16 %v61
    %v94 = vunpack.c.l.b16 %v62
    %v95 = vunpack.c.l.b16 %v63
    %v96 = vunpack.c.l.b16 %v64
    %v97 = vpack.c.b16 %v82, %v81
    %v98 = vpack.c.b16 %v84, %v83
    %v99 = vpack.c.b16 %v86, %v85
    %v100 = vpack.c.b16 %v88, %v87
    %v101 = vpack.c.b16 %v90, %v89
    %v102 = vpack.c.b16 %v92, %v91
    %v103 = vpack.c.b16 %v94, %v93
    %v104 = vpack.c.b16 %v96, %v95
    %113 = vmatprep.subr.bf16.mxu0 0
    %114 = vmatpush1.bf16.msra.mxu0 %v97
    %115 = vmatprep.subr.bf16.mxu0 0
    %116 = vmatpush1.bf16.msra.mxu0 %v98
    %117 = vmatprep.subr.bf16.mxu0 0
    %118 = vmatpush1.bf16.msra.mxu0 %v99
    %119 = vmatprep.subr.bf16.mxu0 0
    %120 = vmatpush1.bf16.msra.mxu0 %v100
    %121 = vmatprep.subr.bf16.mxu0 0
    %122 = vmatpush1.bf16.msra.mxu0 %v101
    %123 = vmatprep.subr.bf16.mxu0 0
    %124 = vmatpush1.bf16.msra.mxu0 %v102
    %125 = vmatprep.subr.bf16.mxu0 0
    %126 = vmatpush1.bf16.msra.mxu0 %v103
    %127 = vmatprep.subr.bf16.mxu0 0
    %128 = vmatpush1.bf16.msra.mxu0 %v104
    %129 = vmatprep.subr.bf16.mxu0 0
    %130 = vmatpush1.bf16.msra.mxu0 0
    %131 = vmatprep.subr.bf16.mxu0 0
    %132 = vmatpush1.bf16.msra.mxu0 0
    %133 = vmatprep.subr.bf16.mxu0 0
    %134 = vmatpush1.bf16.msra.mxu0 0
    %135 = vmatprep.subr.bf16.mxu0 0
    %136 = vmatpush1.bf16.msra.mxu0 0
    %137 = vmatprep.subr.bf16.mxu0 0
    %138 = vmatpush1.bf16.msra.mxu0 0
    %139 = vmatprep.subr.bf16.mxu0 0
    %140 = vmatpush1.bf16.msra.mxu0 0
    %141 = vmatprep.subr.bf16.mxu0 0
    %142 = vmatpush1.bf16.msra.mxu0 0
    %143 = vmatprep.subr.bf16.mxu0 0
    %144 = vmatpush1.bf16.msra.mxu0 0
    %145 = vmatprep.mubr.bf16.mxu0 0
    %146 = vmatmul.mubr.bf16.gmra.mrb[0].mxu0 %v48
    %v147 = vpop.f32.mrb[0].mxu0
    %v148 = vadd.f32 0.0, %v147
    %v149 = vpop.f32.mrb[0].mxu0
    %v150 = vpop.f32.mrb[0].mxu0
    %v151 = vpop.f32.mrb[0].mxu0
    %152 = vdwg.mxu0
    %v153 = vld [vmem:[#allocation7] sm:$0x1]
    %v154 = vrot.slane %v148, 4
    %v155 = vadd.f32 %v148, %v154
    %v156 = vrot.slane %v155, 2
    %v157 = vadd.f32 %v155, %v156
    %v158 = vrot.slane %v157, 1
    %v159 = vadd.f32 %v157, %v158
    %v160 = vadd.f32 %v153, %v159
    %161 = vst [vmem:[#allocation7] sm:$0x1] %v160
    %v162 = vld [vmem:[#allocation8] sm:$0x1]
    %v163 = vmul.f32 %v148, %v148
    %v164 = vrot.slane %v163, 4
    %v165 = vadd.f32 %v163, %v164
    %v166 = vrot.slane %v165, 2
    %v167 = vadd.f32 %v165, %v166
    %v168 = vrot.slane %v167, 1
    %v169 = vadd.f32 %v167, %v168
    %v170 = vadd.f32 %v162, %v169
    %171 = vst [vmem:[#allocation8] sm:$0x1] %v170
    // Predicated region
    $region22: #{_mlp_forward_impl.2} parent=1 // pred_check
      _
    $region23: #{_mlp_forward_impl.2} parent=1 // pred_check_branch
      %173 = sbr.rel (0) target = $region25
    $region24: #{_mlp_forward_impl.2} parent=1 // pred_region
      %s175 = ssub.s32 16, 16
      %176 = vsyncadd [#allocation4], %s175
      %s178 = sshll.u32 [#allocation7], 4
      %s179 = int_to_ptr.vmem [resolvable:$true] %s178
      %181 = dma.vmem_to_hbm [thread:$0]  %s179, 16, %s2, [#allocation4]
    $region25: #{_mlp_forward_impl.2} parent=1 // pred_fallthru
      _
    // Predicated region
    $region26: #{_mlp_forward_impl.2} parent=1 // pred_check
      _
    $region27: #{_mlp_forward_impl.2} parent=1 // pred_check_branch
      %183 = sbr.rel (0) target = $region29
    $region28: #{_mlp_forward_impl.2} parent=1 // pred_region
      %s185 = ssub.s32 16, 16
      %186 = vsyncadd [#allocation9], %s185
      %s188 = sshll.u32 [#allocation8], 4
      %s189 = int_to_ptr.vmem [resolvable:$true] %s188
      %191 = dma.vmem_to_hbm [thread:$0]  %s189, 16, %s3, [#allocation9]
    $region29: #{_mlp_forward_impl.2} parent=1 // pred_fallthru
      _
    // Predicated region
    $region30: #{_mlp_forward_impl.2} parent=1 // pred_check
      _
    $region31: #{_mlp_forward_impl.2} parent=1 // pred_check_branch
      %193 = sbr.rel (0) target = $region33
    $region32: #{_mlp_forward_impl.2} parent=1 // pred_region
      %194 = dma.done [#allocation4], 16
    $region33: #{_mlp_forward_impl.2} parent=1 // pred_fallthru
      _
    // Predicated region
    $region34: #{_mlp_forward_impl.2} parent=1 // pred_check
      _
    $region35: #{_mlp_forward_impl.2} parent=1 // pred_check_branch
      %196 = sbr.rel (0) target = $region37
    $region36: #{_mlp_forward_impl.2} parent=1 // pred_region
      %197 = dma.done [#allocation9], 16
    $region37: #{_mlp_forward_impl.2} parent=1 // pred_fallthru
      _
    %198 = vsyncpa [#allocation3], 1
    %199 = vsyncpa [#allocation6], 1
    %200 = vsyncpa [#allocation4], 1
    %201 = vsyncpa [#allocation9], 1

// kernel: _mlp_forward_impl.3
$region0: #{_mlp_forward_impl.3}
  #allocation0 [shape = 'u32[]', space=smem, size = 0x4, offset = 0x4, fixed_abs, tag = 'smem constant byte address 0x4 - core index']
  #allocation1 [shape = 'u32[144,128]{1,0:T(1,128)}', space=vmem, size = 0x12000, scoped, tag = 'internal scratch']
  %s0 = inlined_call_operand.hbm [shape: bf16[8,128], index: 0, kind: input, shape index: {}]
  %s1 = inlined_call_operand.hbm [shape: f32[1,128], index: 1, kind: input, shape index: {}]
  %s2 = inlined_call_operand.hbm [shape: f32[1,128], index: 2, kind: input, shape index: {}]
  %s3 = inlined_call_operand.hbm [shape: bf16[128,128], index: 3, kind: input, shape index: {}]
  %s4 = inlined_call_operand.hbm [shape: bf16[128,128], index: 4, kind: input, shape index: {}]
  %s5 = inlined_call_operand.hbm [shape: f32[1,128], index: 5, kind: input, shape index: {}]
  %s6 = inlined_call_operand.hbm [shape: bf16[128,128], index: 6, kind: input, shape index: {}]
  %s7 = inlined_call_operand.hbm [shape: f32[1,128], index: 7, kind: input, shape index: {}]
  %s8 = inlined_call_operand.hbm [shape: f32[8,128], index: 8, kind: output, shape index: {}]
  %s9 = sld [smem:[#allocation0]]
  $region74: #{_mlp_forward_impl.3} parent=0
    _
  %s11 = ssub.s32 1, %s9
  %s12 = scalar_select 0, %s11, %s9
  $region1: #{_mlp_forward_impl.3} parent=0
    #allocation2 [shape = 'u8[2048]{0}', space=vmem, size = 0x800, scoped, tag = 'input window, operand 0, single buffered']
    #allocation3 [shape = 's32[1]{0}', space=sflag, size = 0x4, scoped, tag = 'scoped memory for _mlp_forward_impl.3']
    #allocation4 [shape = 's32[1]{0}', space=sflag, size = 0x4, scoped, tag = 'scoped memory for _mlp_forward_impl.3']
    #allocation5 [shape = 'u8[512]{0}', space=vmem, size = 0x400, scoped, tag = 'input window, operand 1, single buffered']
    #allocation6 [shape = 's32[1]{0}', space=sflag, size = 0x4, scoped, tag = 'scoped memory for _mlp_forward_impl.3']
    #allocation7 [shape = 'u8[512]{0}', space=vmem, size = 0x400, scoped, tag = 'input window, operand 2, single buffered']
    #allocation8 [shape = 'u8[32768]{0}', space=vmem, size = 0x8000, scoped, tag = 'input window, operand 3, single buffered']
    #allocation9 [shape = 's32[1]{0}', space=sflag, size = 0x4, scoped, tag = 'scoped memory for _mlp_forward_impl.3']
    #allocation10 [shape = 'u8[32768]{0}', space=vmem, size = 0x8000, scoped, tag = 'input window, operand 4, single buffered']
    #allocation11 [shape = 'u8[512]{0}', space=vmem, size = 0x400, scoped, tag = 'input window, operand 5, single buffered']
    #allocation12 [shape = 's32[1]{0}', space=sflag, size = 0x4, scoped, tag = 'scoped memory for _mlp_forward_impl.3']
    #allocation13 [shape = 'u8[32768]{0}', space=vmem, size = 0x8000, scoped, tag = 'input window, operand 6, single buffered']
    #allocation14 [shape = 'u8[512]{0}', space=vmem, size = 0x400, scoped, tag = 'input window, operand 7, single buffered']
    #allocation15 [shape = 's32[1]{0}', space=sflag, size = 0x4, scoped, tag = 'scoped memory for _mlp_forward_impl.3']
    #allocation16 [shape = 'u8[4096]{0}', space=vmem, size = 0x1000, scoped, tag = 'output window, operand 0, single buffered']
    %13 = vsyncpa [#allocation3], 0
    %14 = vsyncpa [#allocation6], 0
    %15 = vsyncpa [#allocation9], 0
    %16 = vsyncpa [#allocation12], 0
    %17 = vsyncpa [#allocation15], 0
    %18 = vsyncpa [#allocation4], 0
    // Predicated region
    $region2: #{_mlp_forward_impl.3} parent=1 // pred_check
      _
    $region3: #{_mlp_forward_impl.3} parent=1 // pred_check_branch
      %20 = sbr.rel (0) target = $region5
    $region4: #{_mlp_forward_impl.3} parent=1 // pred_region
      %s22 = ssub.s32 64, 64
      %23 = vsyncadd [#allocation3], %s22
      %s25 = sshll.u32 [#allocation2], 4
      %s26 = int_to_ptr.vmem [resolvable:$true] %s25
      %28 = dma.hbm_to_vmem [thread:$0]  %s0, 64, %s26, [#allocation3]
    $region5: #{_mlp_forward_impl.3} parent=1 // pred_fallthru
      _
    // Predicated region
    $region6: #{_mlp_forward_impl.3} parent=1 // pred_check
      _
    $region7: #{_mlp_forward_impl.3} parent=1 // pred_check_branch
      %30 = sbr.rel (0) target = $region9
    $region8: #{_mlp_forward_impl.3} parent=1 // pred_region
      %s32 = ssub.s32 16, 16
      %33 = vsyncadd [#allocation6], %s32
      %s35 = sshll.u32 [#allocation5], 4
      %s36 = int_to_ptr.vmem [resolvable:$true] %s35
      %38 = dma.hbm_to_vmem [thread:$0]  %s1, 16, %s36, [#allocation6]
    $region9: #{_mlp_forward_impl.3} parent=1 // pred_fallthru
      _
    // Predicated region
    $region10: #{_mlp_forward_impl.3} parent=1 // pred_check
      _
    $region11: #{_mlp_forward_impl.3} parent=1 // pred_check_branch
      %40 = sbr.rel (0) target = $region13
    $region12: #{_mlp_forward_impl.3} parent=1 // pred_region
      %s42 = ssub.s32 16, 16
      %43 = vsyncadd [#allocation6], %s42
      %s45 = sshll.u32 [#allocation7], 4
      %s46 = int_to_ptr.vmem [resolvable:$true] %s45
      %48 = dma.hbm_to_vmem [thread:$0]  %s2, 16, %s46, [#allocation6]
    $region13: #{_mlp_forward_impl.3} parent=1 // pred_fallthru
      _
    // Predicated region
    $region14: #{_mlp_forward_impl.3} parent=1 // pred_check
      _
    $region15: #{_mlp_forward_impl.3} parent=1 // pred_check_branch
      %50 = sbr.rel (0) target = $region17
    $region16: #{_mlp_forward_impl.3} parent=1 // pred_region
      %s52 = ssub.s32 1024, 1024
      %53 = vsyncadd [#allocation9], %s52
      %s54 = sshll.u32 [#allocation8], 4
      %s55 = int_to_ptr.vmem [resolvable:$true] %s54
      %60 = dma.hbm_to_vmem [thread:$0]  %s3, 1024, %s55, [#allocation9], 64, 64, 4
    $region17: #{_mlp_forward_impl.3} parent=1 // pred_fallthru
      _
    // Predicated region
    $region18: #{_mlp_forward_impl.3} parent=1 // pred_check
      _
    $region19: #{_mlp_forward_impl.3} parent=1 // pred_check_branch
      %62 = sbr.rel (0) target = $region21
    $region20: #{_mlp_forward_impl.3} parent=1 // pred_region
      %s64 = ssub.s32 1024, 1024
      %65 = vsyncadd [#allocation9], %s64
      %s66 = sshll.u32 [#allocation10], 4
      %s67 = int_to_ptr.vmem [resolvable:$true] %s66
      %72 = dma.hbm_to_vmem [thread:$0]  %s4, 1024, %s67, [#allocation9], 64, 64, 4
    $region21: #{_mlp_forward_impl.3} parent=1 // pred_fallthru
      _
    // Predicated region
    $region22: #{_mlp_forward_impl.3} parent=1 // pred_check
      _
    $region23: #{_mlp_forward_impl.3} parent=1 // pred_check_branch
      %74 = sbr.rel (0) target = $region25
    $region24: #{_mlp_forward_impl.3} parent=1 // pred_region
      %s76 = ssub.s32 16, 16
      %77 = vsyncadd [#allocation12], %s76
      %s79 = sshll.u32 [#allocation11], 4
      %s80 = int_to_ptr.vmem [resolvable:$true] %s79
      %82 = dma.hbm_to_vmem [thread:$0]  %s5, 16, %s80, [#allocation12]
    $region25: #{_mlp_forward_impl.3} parent=1 // pred_fallthru
      _
    // Predicated region
    $region26: #{_mlp_forward_impl.3} parent=1 // pred_check
      _
    $region27: #{_mlp_forward_impl.3} parent=1 // pred_check_branch
      %84 = sbr.rel (0) target = $region29
    $region28: #{_mlp_forward_impl.3} parent=1 // pred_region
      %s86 = ssub.s32 1024, 1024
      %87 = vsyncadd [#allocation12], %s86
      %s88 = sshll.u32 [#allocation13], 4
      %s89 = int_to_ptr.vmem [resolvable:$true] %s88
      %94 = dma.hbm_to_vmem [thread:$0]  %s6, 1024, %s89, [#allocation12], 64, 64, 4
    $region29: #{_mlp_forward_impl.3} parent=1 // pred_fallthru
      _
    // Predicated region
    $region30: #{_mlp_forward_impl.3} parent=1 // pred_check
      _
    $region31: #{_mlp_forward_impl.3} parent=1 // pred_check_branch
      %96 = sbr.rel (0) target = $region33
    $region32: #{_mlp_forward_impl.3} parent=1 // pred_region
      %s98 = ssub.s32 16, 16
      %99 = vsyncadd [#allocation15], %s98
      %s101 = sshll.u32 [#allocation14], 4
      %s102 = int_to_ptr.vmem [resolvable:$true] %s101
      %104 = dma.hbm_to_vmem [thread:$0]  %s7, 16, %s102, [#allocation15]
    $region33: #{_mlp_forward_impl.3} parent=1 // pred_fallthru
      _
    // Predicated region
    $region34: #{_mlp_forward_impl.3} parent=1 // pred_check
      _
    $region35: #{_mlp_forward_impl.3} parent=1 // pred_check_branch
      %106 = sbr.rel (0) target = $region37
    $region36: #{_mlp_forward_impl.3} parent=1 // pred_region
      %107 = dma.done [#allocation3], 64
    $region37: #{_mlp_forward_impl.3} parent=1 // pred_fallthru
      _
    // Predicated region
    $region38: #{_mlp_forward_impl.3} parent=1 // pred_check
      _
    $region39: #{_mlp_forward_impl.3} parent=1 // pred_check_branch
      %109 = sbr.rel (0) target = $region41
    $region40: #{_mlp_forward_impl.3} parent=1 // pred_region
      %110 = dma.done [#allocation6], 16
    $region41: #{_mlp_forward_impl.3} parent=1 // pred_fallthru
      _
    // Predicated region
    $region42: #{_mlp_forward_impl.3} parent=1 // pred_check
      _
    $region43: #{_mlp_forward_impl.3} parent=1 // pred_check_branch
      %112 = sbr.rel (0) target = $region45
    $region44: #{_mlp_forward_impl.3} parent=1 // pred_region
      %113 = dma.done [#allocation6], 16
    $region45: #{_mlp_forward_impl.3} parent=1 // pred_fallthru
      _
    // Predicated region
    $region46: #{_mlp_forward_impl.3} parent=1 // pred_check
      _
    $region47: #{_mlp_forward_impl.3} parent=1 // pred_check_branch
      %115 = sbr.rel (0) target = $region49
    $region48: #{_mlp_forward_impl.3} parent=1 // pred_region
      %116 = dma.done [#allocation9], 1024
    $region49: #{_mlp_forward_impl.3} parent=1 // pred_fallthru
      _
    // Predicated region
    $region50: #{_mlp_forward_impl.3} parent=1 // pred_check
      _
    $region51: #{_mlp_forward_impl.3} parent=1 // pred_check_branch
      %118 = sbr.rel (0) target = $region53
    $region52: #{_mlp_forward_impl.3} parent=1 // pred_region
      %119 = dma.done [#allocation9], 1024
    $region53: #{_mlp_forward_impl.3} parent=1 // pred_fallthru
      _
    // Predicated region
    $region54: #{_mlp_forward_impl.3} parent=1 // pred_check
      _
    $region55: #{_mlp_forward_impl.3} parent=1 // pred_check_branch
      %121 = sbr.rel (0) target = $region57
    $region56: #{_mlp_forward_impl.3} parent=1 // pred_region
      %122 = dma.done [#allocation12], 16
    $region57: #{_mlp_forward_impl.3} parent=1 // pred_fallthru
      _
    // Predicated region
    $region58: #{_mlp_forward_impl.3} parent=1 // pred_check
      _
    $region59: #{_mlp_forward_impl.3} parent=1 // pred_check_branch
      %124 = sbr.rel (0) target = $region61
    $region60: #{_mlp_forward_impl.3} parent=1 // pred_region
      %125 = dma.done [#allocation12], 1024
    $region61: #{_mlp_forward_impl.3} parent=1 // pred_fallthru
      _
    // Predicated region
    $region62: #{_mlp_forward_impl.3} parent=1 // pred_check
      _
    $region63: #{_mlp_forward_impl.3} parent=1 // pred_check_branch
      %127 = sbr.rel (0) target = $region65
    $region64: #{_mlp_forward_impl.3} parent=1 // pred_region
      %128 = dma.done [#allocation15], 16
    $region65: #{_mlp_forward_impl.3} parent=1 // pred_fallthru
      _
    %v130 = vld [vmem:[#allocation2] sm:$0xf]
    %v131 = vld [vmem:[#allocation8] sm:$0xf]
    %v132 = vld [vmem:[#allocation8 + $0x4] sm:$0xf]
    %v133 = vld [vmem:[#allocation8 + $0x8] sm:$0xf]
    %v134 = vld [vmem:[#allocation8 + $0xc] sm:$0xf]
    %v135 = vld [vmem:[#allocation8 + $0x10] sm:$0xf]
    %v136 = vld [vmem:[#allocation8 + $0x14] sm:$0xf]
    %v137 = vld [vmem:[#allocation8 + $0x18] sm:$0xf]
    %v138 = vld [vmem:[#allocation8 + $0x1c] sm:$0xf]
    %v139 = vld [vmem:[#allocation8 + $0x20] sm:$0xf]
    %v140 = vld [vmem:[#allocation8 + $0x24] sm:$0xf]
    %v141 = vld [vmem:[#allocation8 + $0x28] sm:$0xf]
    %v142 = vld [vmem:[#allocation8 + $0x2c] sm:$0xf]
    %v143 = vld [vmem:[#allocation8 + $0x30] sm:$0xf]
    %v144 = vld [vmem:[#allocation8 + $0x34] sm:$0xf]
    %v145 = vld [vmem:[#allocation8 + $0x38] sm:$0xf]
    %v146 = vld [vmem:[#allocation8 + $0x3c] sm:$0xf]
    %v163 = vunpack.c.l.b16 %v131
    %v164 = vunpack.c.l.b16 %v132
    %v165 = vunpack.c.l.b16 %v133
    %v166 = vunpack.c.l.b16 %v134
    %v167 = vunpack.c.l.b16 %v135
    %v168 = vunpack.c.l.b16 %v136
    %v169 = vunpack.c.l.b16 %v137
    %v170 = vunpack.c.l.b16 %v138
    %v171 = vunpack.c.l.b16 %v139
    %v172 = vunpack.c.l.b16 %v140
    %v173 = vunpack.c.l.b16 %v141
    %v174 = vunpack.c.l.b16 %v142
    %v175 = vunpack.c.l.b16 %v143
    %v176 = vunpack.c.l.b16 %v144
    %v177 = vunpack.c.l.b16 %v145
    %v178 = vunpack.c.l.b16 %v146
    %v179 = vpack.c.b16 %v164, %v163
    %v180 = vpack.c.b16 %v166, %v165
    %v181 = vpack.c.b16 %v168, %v167
    %v182 = vpack.c.b16 %v170, %v169
    %v183 = vpack.c.b16 %v172, %v171
    %v184 = vpack.c.b16 %v174, %v173
    %v185 = vpack.c.b16 %v176, %v175
    %v186 = vpack.c.b16 %v178, %v177
    %195 = vmatprep.subr.bf16.mxu0 0
    %196 = vmatpush1.bf16.msra.mxu0 %v179
    %197 = vmatprep.subr.bf16.mxu0 0
    %198 = vmatpush1.bf16.msra.mxu0 %v180
    %199 = vmatprep.subr.bf16.mxu0 0
    %200 = vmatpush1.bf16.msra.mxu0 %v181
    %201 = vmatprep.subr.bf16.mxu0 0
    %202 = vmatpush1.bf16.msra.mxu0 %v182
    %203 = vmatprep.subr.bf16.mxu0 0
    %204 = vmatpush1.bf16.msra.mxu0 %v183
    %205 = vmatprep.subr.bf16.mxu0 0
    %206 = vmatpush1.bf16.msra.mxu0 %v184
    %207 = vmatprep.subr.bf16.mxu0 0
    %208 = vmatpush1.bf16.msra.mxu0 %v185
    %209 = vmatprep.subr.bf16.mxu0 0
    %210 = vmatpush1.bf16.msra.mxu0 %v186
    %211 = vmatprep.subr.bf16.mxu0 0
    %212 = vmatpush1.bf16.msra.mxu0 0
    %213 = vmatprep.subr.bf16.mxu0 0
    %214 = vmatpush1.bf16.msra.mxu0 0
    %215 = vmatprep.subr.bf16.mxu0 0
    %216 = vmatpush1.bf16.msra.mxu0 0
    %217 = vmatprep.subr.bf16.mxu0 0
    %218 = vmatpush1.bf16.msra.mxu0 0
    %219 = vmatprep.subr.bf16.mxu0 0
    %220 = vmatpush1.bf16.msra.mxu0 0
    %221 = vmatprep.subr.bf16.mxu0 0
    %222 = vmatpush1.bf16.msra.mxu0 0
    %223 = vmatprep.subr.bf16.mxu0 0
    %224 = vmatpush1.bf16.msra.mxu0 0
    %225 = vmatprep.subr.bf16.mxu0 0
    %226 = vmatpush1.bf16.msra.mxu0 0
    %227 = vmatprep.mubr.bf16.mxu0 0
    %228 = vmatmul.mubr.bf16.gmra.mrb[0].mxu0 %v130
    %v229 = vpop.f32.mrb[0].mxu0
    %v230 = vadd.f32 0.0, %v229
    %v231 = vpop.f32.mrb[0].mxu0
    %v232 = vpop.f32.mrb[0].mxu0
    %v233 = vpop.f32.mrb[0].mxu0
    %234 = vdwg.mxu0
    %v235 = vld [vmem:[#allocation5] sm:$0x1]
    %v237 = vlaneseq
    %v238 = vshrl.u32 %v237, 7
    %v239 = vsub.s32 0, %v238
    %v240 = vrot.slane %v235, %v239
    %v242 = vmul.f32 %v230, %v240
    %v243 = vld [vmem:[#allocation7] sm:$0x1]
    %v245 = vlaneseq
    %v246 = vshrl.u32 %v245, 7
    %v247 = vsub.s32 0, %v246
    %v248 = vrot.slane %v243, %v247
    %v250 = vadd.f32 %v242, %v248
    %v251 = vmax.f32 %v250, 0.0
    %v252 = vpack.c.bf16 %v251, %v251
    %v253 = vld [vmem:[#allocation10] sm:$0xf]
    %v254 = vld [vmem:[#allocation10 + $0x4] sm:$0xf]
    %v255 = vld [vmem:[#allocation10 + $0x8] sm:$0xf]
    %v256 = vld [vmem:[#allocation10 + $0xc] sm:$0xf]
    %v257 = vld [vmem:[#allocation10 + $0x10] sm:$0xf]
    %v258 = vld [vmem:[#allocation10 + $0x14] sm:$0xf]
    %v259 = vld [vmem:[#allocation10 + $0x18] sm:$0xf]
    %v260 = vld [vmem:[#allocation10 + $0x1c] sm:$0xf]
    %v261 = vld [vmem:[#allocation10 + $0x20] sm:$0xf]
    %v262 = vld [vmem:[#allocation10 + $0x24] sm:$0xf]
    %v263 = vld [vmem:[#allocation10 + $0x28] sm:$0xf]
    %v264 = vld [vmem:[#allocation10 + $0x2c] sm:$0xf]
    %v265 = vld [vmem:[#allocation10 + $0x30] sm:$0xf]
    %v266 = vld [vmem:[#allocation10 + $0x34] sm:$0xf]
    %v267 = vld [vmem:[#allocation10 + $0x38] sm:$0xf]
    %v268 = vld [vmem:[#allocation10 + $0x3c] sm:$0xf]
    %v269 = vld [vmem:[#allocation11] sm:$0x1]
    %v271 = vlaneseq
    %v272 = vshrl.u32 %v271, 7
    %v273 = vsub.s32 0, %v272
    %v274 = vrot.slane %v269, %v273
    %v292 = vunpack.c.l.b16 %v253
    %v293 = vunpack.c.l.b16 %v254
    %v294 = vunpack.c.l.b16 %v255
    %v295 = vunpack.c.l.b16 %v256
    %v296 = vunpack.c.l.b16 %v257
    %v297 = vunpack.c.l.b16 %v258
    %v298 = vunpack.c.l.b16 %v259
    %v299 = vunpack.c.l.b16 %v260
    %v300 = vunpack.c.l.b16 %v261
    %v301 = vunpack.c.l.b16 %v262
    %v302 = vunpack.c.l.b16 %v263
    %v303 = vunpack.c.l.b16 %v264
    %v304 = vunpack.c.l.b16 %v265
    %v305 = vunpack.c.l.b16 %v266
    %v306 = vunpack.c.l.b16 %v267
    %v307 = vunpack.c.l.b16 %v268
    %v308 = vpack.c.b16 %v293, %v292
    %v309 = vpack.c.b16 %v295, %v294
    %v310 = vpack.c.b16 %v297, %v296
    %v311 = vpack.c.b16 %v299, %v298
    %v312 = vpack.c.b16 %v301, %v300
    %v313 = vpack.c.b16 %v303, %v302
    %v314 = vpack.c.b16 %v305, %v304
    %v315 = vpack.c.b16 %v307, %v306
    %324 = vmatprep.subr.bf16.mxu0 0
    %325 = vmatpush1.bf16.msra.mxu0 %v308
    %326 = vmatprep.subr.bf16.mxu0 0
    %327 = vmatpush1.bf16.msra.mxu0 %v309
    %328 = vmatprep.subr.bf16.mxu0 0
    %329 = vmatpush1.bf16.msra.mxu0 %v310
    %330 = vmatprep.subr.bf16.mxu0 0
    %331 = vmatpush1.bf16.msra.mxu0 %v311
    %332 = vmatprep.subr.bf16.mxu0 0
    %333 = vmatpush1.bf16.msra.mxu0 %v312
    %334 = vmatprep.subr.bf16.mxu0 0
    %335 = vmatpush1.bf16.msra.mxu0 %v313
    %336 = vmatprep.subr.bf16.mxu0 0
    %337 = vmatpush1.bf16.msra.mxu0 %v314
    %338 = vmatprep.subr.bf16.mxu0 0
    %339 = vmatpush1.bf16.msra.mxu0 %v315
    %340 = vmatprep.subr.bf16.mxu0 0
    %341 = vmatpush1.bf16.msra.mxu0 0
    %342 = vmatprep.subr.bf16.mxu0 0
    %343 = vmatpush1.bf16.msra.mxu0 0
    %344 = vmatprep.subr.bf16.mxu0 0
    %345 = vmatpush1.bf16.msra.mxu0 0
    %346 = vmatprep.subr.bf16.mxu0 0
    %347 = vmatpush1.bf16.msra.mxu0 0
    %348 = vmatprep.subr.bf16.mxu0 0
    %349 = vmatpush1.bf16.msra.mxu0 0
    %350 = vmatprep.subr.bf16.mxu0 0
    %351 = vmatpush1.bf16.msra.mxu0 0
    %352 = vmatprep.subr.bf16.mxu0 0
    %353 = vmatpush1.bf16.msra.mxu0 0
    %354 = vmatprep.subr.bf16.mxu0 0
    %355 = vmatpush1.bf16.msra.mxu0 0
    %356 = vmatprep.mubr.bf16.mxu0 0
    %357 = vmatmul.mubr.bf16.gmra.mrb[0].mxu0 %v252
    %v358 = vpop.f32.mrb[0].mxu0
    %v359 = vadd.f32 %v274, %v358
    %v360 = vpop.f32.mrb[0].mxu0
    %v361 = vpop.f32.mrb[0].mxu0
    %v362 = vpop.f32.mrb[0].mxu0
    %363 = vdwg.mxu0
    %v364 = vmax.f32 %v359, 0.0
    %v365 = vpack.c.bf16 %v364, %v364
    %v366 = vld [vmem:[#allocation13] sm:$0xf]
    %v367 = vld [vmem:[#allocation13 + $0x4] sm:$0xf]
    %v368 = vld [vmem:[#allocation13 + $0x8] sm:$0xf]
    %v369 = vld [vmem:[#allocation13 + $0xc] sm:$0xf]
    %v370 = vld [vmem:[#allocation13 + $0x10] sm:$0xf]
    %v371 = vld [vmem:[#allocation13 + $0x14] sm:$0xf]
    %v372 = vld [vmem:[#allocation13 + $0x18] sm:$0xf]
    %v373 = vld [vmem:[#allocation13 + $0x1c] sm:$0xf]
    %v374 = vld [vmem:[#allocation13 + $0x20] sm:$0xf]
    %v375 = vld [vmem:[#allocation13 + $0x24] sm:$0xf]
    %v376 = vld [vmem:[#allocation13 + $0x28] sm:$0xf]
    %v377 = vld [vmem:[#allocation13 + $0x2c] sm:$0xf]
    %v378 = vld [vmem:[#allocation13 + $0x30] sm:$0xf]
    %v379 = vld [vmem:[#allocation13 + $0x34] sm:$0xf]
    %v380 = vld [vmem:[#allocation13 + $0x38] sm:$0xf]
    %v381 = vld [vmem:[#allocation13 + $0x3c] sm:$0xf]
    %v382 = vld [vmem:[#allocation14] sm:$0x1]
    %v384 = vlaneseq
    %v385 = vshrl.u32 %v384, 7
    %v386 = vsub.s32 0, %v385
    %v387 = vrot.slane %v382, %v386
    %v405 = vunpack.c.l.b16 %v366
    %v406 = vunpack.c.l.b16 %v367
    %v407 = vunpack.c.l.b16 %v368
    %v408 = vunpack.c.l.b16 %v369
    %v409 = vunpack.c.l.b16 %v370
    %v410 = vunpack.c.l.b16 %v371
    %v411 = vunpack.c.l.b16 %v372
    %v412 = vunpack.c.l.b16 %v373
    %v413 = vunpack.c.l.b16 %v374
    %v414 = vunpack.c.l.b16 %v375
    %v415 = vunpack.c.l.b16 %v376
    %v416 = vunpack.c.l.b16 %v377
    %v417 = vunpack.c.l.b16 %v378
    %v418 = vunpack.c.l.b16 %v379
    %v419 = vunpack.c.l.b16 %v380
    %v420 = vunpack.c.l.b16 %v381
    %v421 = vpack.c.b16 %v406, %v405
    %v422 = vpack.c.b16 %v408, %v407
    %v423 = vpack.c.b16 %v410, %v409
    %v424 = vpack.c.b16 %v412, %v411
    %v425 = vpack.c.b16 %v414, %v413
    %v426 = vpack.c.b16 %v416, %v415
    %v427 = vpack.c.b16 %v418, %v417
    %v428 = vpack.c.b16 %v420, %v419
    %437 = vmatprep.subr.bf16.mxu0 0
    %438 = vmatpush1.bf16.msra.mxu0 %v421
    %439 = vmatprep.subr.bf16.mxu0 0
    %440 = vmatpush1.bf16.msra.mxu0 %v422
    %441 = vmatprep.subr.bf16.mxu0 0
    %442 = vmatpush1.bf16.msra.mxu0 %v423
    %443 = vmatprep.subr.bf16.mxu0 0
    %444 = vmatpush1.bf16.msra.mxu0 %v424
    %445 = vmatprep.subr.bf16.mxu0 0
    %446 = vmatpush1.bf16.msra.mxu0 %v425
    %447 = vmatprep.subr.bf16.mxu0 0
    %448 = vmatpush1.bf16.msra.mxu0 %v426
    %449 = vmatprep.subr.bf16.mxu0 0
    %450 = vmatpush1.bf16.msra.mxu0 %v427
    %451 = vmatprep.subr.bf16.mxu0 0
    %452 = vmatpush1.bf16.msra.mxu0 %v428
    %453 = vmatprep.subr.bf16.mxu0 0
    %454 = vmatpush1.bf16.msra.mxu0 0
    %455 = vmatprep.subr.bf16.mxu0 0
    %456 = vmatpush1.bf16.msra.mxu0 0
    %457 = vmatprep.subr.bf16.mxu0 0
    %458 = vmatpush1.bf16.msra.mxu0 0
    %459 = vmatprep.subr.bf16.mxu0 0
    %460 = vmatpush1.bf16.msra.mxu0 0
    %461 = vmatprep.subr.bf16.mxu0 0
    %462 = vmatpush1.bf16.msra.mxu0 0
    %463 = vmatprep.subr.bf16.mxu0 0
    %464 = vmatpush1.bf16.msra.mxu0 0
    %465 = vmatprep.subr.bf16.mxu0 0
    %466 = vmatpush1.bf16.msra.mxu0 0
    %467 = vmatprep.subr.bf16.mxu0 0
    %468 = vmatpush1.bf16.msra.mxu0 0
    %469 = vmatprep.mubr.bf16.mxu0 0
    %470 = vmatmul.mubr.bf16.gmra.mrb[0].mxu0 %v365
    %v471 = vpop.f32.mrb[0].mxu0
    %v472 = vadd.f32 %v387, %v471
    %v473 = vpop.f32.mrb[0].mxu0
    %v474 = vpop.f32.mrb[0].mxu0
    %v475 = vpop.f32.mrb[0].mxu0
    %476 = vdwg.mxu0
    %477 = vst [vmem:[#allocation16] sm:$0xff] %v472
    // Predicated region
    $region66: #{_mlp_forward_impl.3} parent=1 // pred_check
      _
    $region67: #{_mlp_forward_impl.3} parent=1 // pred_check_branch
      %479 = sbr.rel (0) target = $region69
    $region68: #{_mlp_forward_impl.3} parent=1 // pred_region
      %s481 = ssub.s32 128, 128
      %482 = vsyncadd [#allocation4], %s481
      %s484 = sshll.u32 [#allocation16], 4
      %s485 = int_to_ptr.vmem [resolvable:$true] %s484
      %487 = dma.vmem_to_hbm [thread:$0]  %s485, 128, %s8, [#allocation4]
    $region69: #{_mlp_forward_impl.3} parent=1 // pred_fallthru
      _
    // Predicated region
    $region70: #{_mlp_forward_impl.3} parent=1 // pred_check
      _
    $region71: #{_mlp_forward_impl.3} parent=1 // pred_check_branch
      %489 = sbr.rel (0) target = $region73
    $region72: #{_mlp_forward_impl.3} parent=1 // pred_region
      %490 = dma.done [#allocation4], 128
    $region73: #{_mlp_forward_impl.3} parent=1 // pred_fallthru
      _
    %491 = vsyncpa [#allocation3], 1
    %492 = vsyncpa [#allocation6], 1
    %493 = vsyncpa [#allocation9], 1
    %494 = vsyncpa [#allocation12], 1
    %495 = vsyncpa [#allocation15], 1
    %496 = vsyncpa [#allocation4], 1

</llo_original>
